<compile_context>
chip_gen: v5e
topology: v5e:2x2
jax: 0.10.0
libtpu: 0.0.40
codegen_flags: <defaults>
</compile_context>

<pallas_src>
from functools import partial

import jax
import jax.numpy as jnp
import numpy as np
from jax.experimental import pallas as pl
from jax.experimental.pallas import tpu as pltpu


def decoder_kernel(ids_ref,            # SMEM  (B,)   int32 token ids
                   emb_hbm,            # HBM   (V, E) f32 embedding table (pl.ANY)
                   w_hbm,              # HBM   (L, E+H, 4H) bf16 fused LSTM weights (pl.ANY)
                   h0_ref, c0_ref,     # VMEM  (L, B, H) f32 initial states (resident)
                   b_ref,              # VMEM  (L, 1, 4H) f32 fused bias
                   fcw_ref,            # VMEM  (H, TILE_V) bf16 fc weight tile (pipelined)
                   fcb_ref,            # VMEM  (1, TILE_V) f32 fc bias tile
                   pred_ref,           # VMEM  (B, TILE_V) f32 prediction tile
                   h_out_ref, c_out_ref,  # VMEM (L, B, H) f32 new states (resident)
                   x_emb,              # scratch (B, E)   f32  gathered embedding rows
                   xh,                 # scratch (B, E+H) bf16 fused [x, h] MXU operand
                   x_top,              # scratch (B, H)   bf16 top-layer hidden (fc LHS)
                   w_vmem,             # scratch (L, E+H, 4H) bf16 fused LSTM weights
                   sem,                # scratch DMA sems (B+1,)
                   *, n_layers, emb_dim, hid_dim, batch, vocab):
    E, H = emb_dim, hid_dim

    # The LSTM stack (and the embedding gather + weight DMA) run once, on the first
    # vocab tile.  States / x_top stay resident in VMEM for the remaining fc tiles.
    @pl.when(pl.program_id(0) == 0)
    def _():
        # --- embedding gather: issue the B small row DMAs first ---------------------
        copies = []
        for b in range(batch):
            idx = jnp.clip(ids_ref[b], 0, vocab - 1)       # clamp (matches jnp.take)
            cp = pltpu.make_async_copy(emb_hbm.at[pl.ds(idx, 1)],
                                       x_emb.at[pl.ds(b, 1)],
                                       sem.at[b])
            cp.start()
            copies.append(cp)

        # --- big fused LSTM weight DMA overlaps the gather latency ------------------
        wcp = pltpu.make_async_copy(w_hbm, w_vmem, sem.at[batch])
        wcp.start()

        for cp in copies:
            cp.wait()

        # dropout on the embedded input: identity (eval / p=0.0 semantics)
        xh[:, :E] = x_emb[...].astype(jnp.bfloat16)         # input slab of [x, h]

        wcp.wait()

        # --- stacked LSTM cells (single step) ----------------------------------------
        for l in range(n_layers):                            # small static loop
            h = h0_ref[l]                                    # (B, H) f32
            c = c0_ref[l]                                    # (B, H) f32
            xh[:, E:] = h.astype(jnp.bfloat16)               # hidden slab of [x, h]
            # one fused matmul per layer; gate order after offline permute: [i, f, o, g]
            gates = (jnp.dot(xh[...], w_vmem[l],
                             preferred_element_type=jnp.float32)
                     + b_ref[l])                             # (B, 4H) f32
            sig = jax.nn.sigmoid(gates[:, :3 * H])           # contiguous 3H slab
            i_g = sig[:, 0 * H:1 * H]
            f_g = sig[:, 1 * H:2 * H]
            o_g = sig[:, 2 * H:3 * H]
            g_g = jnp.tanh(gates[:, 3 * H:])                 # contiguous H slab
            c_new = f_g * c + i_g * g_g
            h_new = o_g * jnp.tanh(c_new)
            h_out_ref[l] = h_new
            c_out_ref[l] = c_new
            xh[:, :E] = h_new.astype(jnp.bfloat16)           # inter-layer dropout = identity

        x_top[...] = xh[:, :E]                               # (B, H) bf16 fc operand

    # --- fc over this vocab tile (weight tile DMA pipelined across the grid) --------
    pred_ref[...] = (jnp.dot(x_top[...], fcw_ref[...],
                             preferred_element_type=jnp.float32)
                     + fcb_ref[...])


def decoder_forward(token_ids, hidden, cell, params, *, tile_v=512):
    """Mirrors Decoder.forward(input, hidden, cell) -> (prediction, hidden, cell)."""
    L, B, H = hidden.shape
    V, E = params["emb"].shape
    assert V % tile_v == 0 and tile_v % 128 == 0
    n_tiles = V // tile_v

    kernel = partial(decoder_kernel, n_layers=L, emb_dim=E, hid_dim=H,
                     batch=B, vocab=V)

    pred, h_out, c_out = pl.pallas_call(
        kernel,
        out_shape=(
            jax.ShapeDtypeStruct((B, V), jnp.float32),
            jax.ShapeDtypeStruct((L, B, H), jnp.float32),
            jax.ShapeDtypeStruct((L, B, H), jnp.float32),
        ),
        grid=(n_tiles,),
        in_specs=[
            pl.BlockSpec(memory_space=pltpu.MemorySpace.SMEM),     # token ids
            pl.BlockSpec(memory_space=pl.ANY),                     # embedding table (HBM)
            pl.BlockSpec(memory_space=pl.ANY),                     # fused LSTM weights (HBM)
            pl.BlockSpec((L, B, H), lambda j: (0, 0, 0)),          # hidden  (resident)
            pl.BlockSpec((L, B, H), lambda j: (0, 0, 0)),          # cell    (resident)
            pl.BlockSpec((L, 1, 4 * H), lambda j: (0, 0, 0)),      # fused LSTM bias
            pl.BlockSpec((H, tile_v), lambda j: (0, j)),           # fc weight tile
            pl.BlockSpec((1, tile_v), lambda j: (0, j)),           # fc bias tile
        ],
        out_specs=(
            pl.BlockSpec((B, tile_v), lambda j: (0, j)),           # prediction tile
            pl.BlockSpec((L, B, H), lambda j: (0, 0, 0)),          # new hidden
            pl.BlockSpec((L, B, H), lambda j: (0, 0, 0)),          # new cell
        ),
        scratch_shapes=[
            pltpu.VMEM((B, E), jnp.float32),                # gathered embedding rows
            pltpu.VMEM((B, E + H), jnp.bfloat16),           # persistent [x, h] operand
            pltpu.VMEM((B, H), jnp.bfloat16),               # top-layer hidden (fc LHS)
            pltpu.VMEM((L, E + H, 4 * H), jnp.bfloat16),    # fused LSTM weights (manual DMA)
            pltpu.SemaphoreType.DMA((B + 1,)),              # B gather sems + 1 weight sem
        ],
        # LSTM runs only at j == 0, so the vocab axis must stay on one core.
        compiler_params=pltpu.CompilerParams(
            dimension_semantics=("arbitrary",)),
    )(token_ids, params["emb"], params["w_cat"], hidden, cell,
      params["b_cat"], params["fc_w_t"], params["fc_b"])
    return pred, h_out, c_out


def init_params(key, output_dim, emb_dim, hid_dim, n_layers):
    # The stacked fused weight layout requires emb_dim == hid_dim (layer 0 input = E).
    assert emb_dim == hid_dim, "stacked fused layer weights require emb_dim == hid_dim"
    V, E, H, L = output_dim, emb_dim, hid_dim, n_layers
    ks = jax.random.split(key, 7)
    scale = 0.1
    emb = scale * jax.random.normal(ks[0], (V, E), jnp.float32)
    w_ih = scale * jax.random.normal(ks[1], (L, 4 * H, E), jnp.float32)   # PyTorch layout
    w_hh = scale * jax.random.normal(ks[2], (L, 4 * H, H), jnp.float32)
    b_ih = scale * jax.random.normal(ks[3], (L, 4 * H), jnp.float32)
    b_hh = scale * jax.random.normal(ks[4], (L, 4 * H), jnp.float32)
    fc_w = scale * jax.random.normal(ks[5], (V, H), jnp.float32)
    fc_b = scale * jax.random.normal(ks[6], (V,), jnp.float32)

    # --- kernel-side packing (glue, done once) -----------------------------------
    # 1) fuse [W_ih; W_hh] -> (L, E+H, 4H) so the kernel does ONE matmul per layer
    # 2) permute gate order (i, f, g, o) -> (i, f, o, g) so all sigmoid gates are a
    #    single contiguous 3H lane slab
    # 3) cast matmul operands to bf16; biases stay f32
    perm = np.concatenate([np.arange(0, H), np.arange(H, 2 * H),
                           np.arange(3 * H, 4 * H), np.arange(2 * H, 3 * H)])
    w_cat = jnp.concatenate([jnp.transpose(w_ih, (0, 2, 1)),
                             jnp.transpose(w_hh, (0, 2, 1))], axis=1)     # (L, E+H, 4H)
    w_cat = w_cat[:, :, perm].astype(jnp.bfloat16)
    b_cat = (b_ih + b_hh)[:, perm][:, None, :]                            # (L, 1, 4H) f32

    return {
        # used by the Pallas kernel
        "emb": emb,                               # (V, E) f32, row-gathered by DMA
        "w_cat": w_cat,                           # (L, E+H, 4H) bf16, gates (i,f,o,g)
        "b_cat": b_cat,                           # (L, 1, 4H) f32
        "fc_w_t": fc_w.T.astype(jnp.bfloat16),    # (H, V) bf16
        "fc_b": fc_b[None, :],                    # (1, V) f32
        # used by the pure-JAX reference (PyTorch layout / gate order)
        "w_ih": w_ih.astype(jnp.bfloat16),
        "w_hh": w_hh.astype(jnp.bfloat16),
        "b_ih": b_ih,
        "b_hh": b_hh,
        "fc_w": fc_w.astype(jnp.bfloat16),
        "fc_b_vec": fc_b,
    }


def reference_forward(token_ids, hidden, cell, params):
    """Pure-JAX reference: torch.nn.LSTM single-step math, unfused, gate order (i,f,g,o)."""
    x = jnp.take(params["emb"], token_ids, axis=0)            # (B, E) f32
    L, _, H = hidden.shape
    h_out, c_out = [], []
    for l in range(L):
        gates = (jnp.dot(x.astype(jnp.bfloat16), params["w_ih"][l].T,
                         preferred_element_type=jnp.float32)
                 + jnp.dot(hidden[l].astype(jnp.bfloat16), params["w_hh"][l].T,
                           preferred_element_type=jnp.float32)
                 + params["b_ih"][l] + params["b_hh"][l])
        i = jax.nn.sigmoid(gates[:, 0 * H:1 * H])
        f = jax.nn.sigmoid(gates[:, 1 * H:2 * H])
        g = jnp.tanh(gates[:, 2 * H:3 * H])
        o = jax.nn.sigmoid(gates[:, 3 * H:4 * H])
        c_new = f * cell[l] + i * g
        h_new = o * jnp.tanh(c_new)
        h_out.append(h_new)
        c_out.append(c_new)
        x = h_new
    pred = (jnp.dot(x.astype(jnp.bfloat16), params["fc_w"].T,
                    preferred_element_type=jnp.float32) + params["fc_b_vec"])
    return pred, jnp.stack(h_out), jnp.stack(c_out)


if __name__ == "__main__":
    # Lane-dense shapes: output_dim (vocab) = 1024, emb_dim = hid_dim = 128,
    # n_layers = 2, batch = 8, vocab tile = 512 (grid of 2 pipelined fc tiles).
    V, E, H, L, B = 1024, 128, 128, 2, 8
    TILE_V = 512

    key = jax.random.PRNGKey(0)
    k_par, k_tok, k_h, k_c = jax.random.split(key, 4)

    params = init_params(k_par, V, E, H, L)
    token_ids = jax.random.randint(k_tok, (B,), 0, V, dtype=jnp.int32)   # `input` (B,)
    hidden = 0.1 * jax.random.normal(k_h, (L, B, H), jnp.float32)
    cell = 0.1 * jax.random.normal(k_c, (L, B, H), jnp.float32)

    pred, h_new, c_new = decoder_forward(token_ids, hidden, cell, params, tile_v=TILE_V)
    jax.block_until_ready((pred, h_new, c_new))

    pred_r, h_r, c_r = reference_forward(token_ids, hidden, cell, params)
    jax.block_until_ready((pred_r, h_r, c_r))

    assert pred.shape == (B, V) and h_new.shape == (L, B, H) and c_new.shape == (L, B, H)
    np.testing.assert_allclose(np.asarray(pred), np.asarray(pred_r), rtol=1e-3, atol=1e-3)
    np.testing.assert_allclose(np.asarray(h_new), np.asarray(h_r), rtol=1e-3, atol=1e-3)
    np.testing.assert_allclose(np.asarray(c_new), np.asarray(c_r), rtol=1e-3, atol=1e-3)

    print("KERNEL_OK")
</pallas_src>

<mosaic_0001>
module attributes {stable_mosaic.version = 11 : i64} {
  func.func @decoder_kernel(%arg0: i32, %arg1: memref<8xi32, #tpu.memory_space<smem>>, %arg2: memref<1024x128xf32, #tpu.memory_space<any>>, %arg3: memref<2x256x512xbf16, #tpu.memory_space<any>>, %arg4: memref<2x8x128xf32, #tpu.memory_space<vmem>>, %arg5: memref<2x8x128xf32, #tpu.memory_space<vmem>>, %arg6: memref<2x1x512xf32, #tpu.memory_space<vmem>>, %arg7: memref<128x512xbf16, #tpu.memory_space<vmem>>, %arg8: memref<1x512xf32, #tpu.memory_space<vmem>>, %arg9: memref<8x512xf32, #tpu.memory_space<vmem>>, %arg10: memref<2x8x128xf32, #tpu.memory_space<vmem>>, %arg11: memref<2x8x128xf32, #tpu.memory_space<vmem>>, %arg12: memref<8x128xf32, #tpu.memory_space<vmem>>, %arg13: memref<8x256xbf16, #tpu.memory_space<vmem>>, %arg14: memref<8x128xbf16, #tpu.memory_space<vmem>>, %arg15: memref<2x256x512xbf16, #tpu.memory_space<vmem>>, %arg16: memref<9x!tpu.dma_semaphore, #tpu.memory_space<semaphore_mem>>) attributes {dimension_semantics = [#tpu.dimension_semantics<arbitrary>], iteration_bounds = array<i64: 2>, scalar_prefetch = 0 : i64, scratch_operands = 5 : i64, tpu.core_type = #tpu.core_type<tc>, window_params = [{transform_indices = @transform_0, window_bounds = array<i64: 8>}, {}, {}, {pipeline_mode = #tpu.pipeline_mode<synchronous>, transform_indices = @transform_3, window_bounds = array<i64: 2, 8, 128>}, {pipeline_mode = #tpu.pipeline_mode<synchronous>, transform_indices = @transform_4, window_bounds = array<i64: 2, 8, 128>}, {pipeline_mode = #tpu.pipeline_mode<synchronous>, transform_indices = @transform_5, window_bounds = array<i64: 2, 1, 512>}, {transform_indices = @transform_6, window_bounds = array<i64: 128, 512>}, {transform_indices = @transform_7, window_bounds = array<i64: 1, 512>}, {transform_indices = @transform_8, window_bounds = array<i64: 8, 512>}, {pipeline_mode = #tpu.pipeline_mode<synchronous>, transform_indices = @transform_9, window_bounds = array<i64: 2, 8, 128>}, {pipeline_mode = #tpu.pipeline_mode<synchronous>, transform_indices = @transform_10, window_bounds = array<i64: 2, 8, 128>}]} {
    %c0_i32 = arith.constant 0 : i32
    %0 = arith.cmpi eq, %arg0, %c0_i32 : i32
    %1 = arith.extui %0 : i1 to i32
    %c0_i32_0 = arith.constant 0 : i32
    %2 = arith.cmpi ne, %1, %c0_i32_0 : i32
    scf.if %2 {
      %c0_8 = arith.constant 0 : index
      %10 = memref.load %arg1[%c0_8] : memref<8xi32, #tpu.memory_space<smem>>
      %c0_i32_9 = arith.constant 0 : i32
      %c1023_i32 = arith.constant 1023 : i32
      %11 = arith.maxsi %c0_i32_9, %10 : i32
      %12 = arith.minsi %c1023_i32, %11 : i32
      %c0_i32_10 = arith.constant 0 : i32
      %c0_i32_11 = arith.constant 0 : i32
      %13 = tpu.memref_slice %arg2[%12, %c0_i32_11] : memref<1024x128xf32, #tpu.memory_space<any>> -> memref<1x128xf32, #tpu.memory_space<any>>
      %c0_i32_12 = arith.constant 0 : i32
      %c0_i32_13 = arith.constant 0 : i32
      %14 = tpu.memref_slice %arg12[%c0_i32_12, %c0_i32_13] : memref<8x128xf32, #tpu.memory_space<vmem>> -> memref<1x128xf32, #tpu.memory_space<vmem>>
      %15 = tpu.memref_slice %arg16[%c0_i32_10] : memref<9x!tpu.dma_semaphore, #tpu.memory_space<semaphore_mem>> -> memref<1x!tpu.dma_semaphore, #tpu.memory_space<semaphore_mem>>
      %16 = tpu.memref_squeeze %15 : memref<1x!tpu.dma_semaphore, #tpu.memory_space<semaphore_mem>> -> memref<!tpu.dma_semaphore, #tpu.memory_space<semaphore_mem>>
      tpu.enqueue_dma source(%13 : memref<1x128xf32, #tpu.memory_space<any>>) target(%14 : memref<1x128xf32, #tpu.memory_space<vmem>>) target_semaphore(%16 : memref<!tpu.dma_semaphore, #tpu.memory_space<semaphore_mem>>)
      %c1 = arith.constant 1 : index
      %17 = memref.load %arg1[%c1] : memref<8xi32, #tpu.memory_space<smem>>
      %c0_i32_14 = arith.constant 0 : i32
      %c1023_i32_15 = arith.constant 1023 : i32
      %18 = arith.maxsi %c0_i32_14, %17 : i32
      %19 = arith.minsi %c1023_i32_15, %18 : i32
      %c1_i32 = arith.constant 1 : i32
      %c0_i32_16 = arith.constant 0 : i32
      %20 = tpu.memref_slice %arg2[%19, %c0_i32_16] : memref<1024x128xf32, #tpu.memory_space<any>> -> memref<1x128xf32, #tpu.memory_space<any>>
      %c1_i32_17 = arith.constant 1 : i32
      %c0_i32_18 = arith.constant 0 : i32
      %21 = tpu.memref_slice %arg12[%c1_i32_17, %c0_i32_18] : memref<8x128xf32, #tpu.memory_space<vmem>> -> memref<1x128xf32, #tpu.memory_space<vmem>>
      %22 = tpu.memref_slice %arg16[%c1_i32] : memref<9x!tpu.dma_semaphore, #tpu.memory_space<semaphore_mem>> -> memref<1x!tpu.dma_semaphore, #tpu.memory_space<semaphore_mem>>
      %23 = tpu.memref_squeeze %22 : memref<1x!tpu.dma_semaphore, #tpu.memory_space<semaphore_mem>> -> memref<!tpu.dma_semaphore, #tpu.memory_space<semaphore_mem>>
      tpu.enqueue_dma source(%20 : memref<1x128xf32, #tpu.memory_space<any>>) target(%21 : memref<1x128xf32, #tpu.memory_space<vmem>>) target_semaphore(%23 : memref<!tpu.dma_semaphore, #tpu.memory_space<semaphore_mem>>)
      %c2 = arith.constant 2 : index
      %24 = memref.load %arg1[%c2] : memref<8xi32, #tpu.memory_space<smem>>
      %c0_i32_19 = arith.constant 0 : i32
      %c1023_i32_20 = arith.constant 1023 : i32
      %25 = arith.maxsi %c0_i32_19, %24 : i32
      %26 = arith.minsi %c1023_i32_20, %25 : i32
      %c2_i32 = arith.constant 2 : i32
      %c0_i32_21 = arith.constant 0 : i32
      %27 = tpu.memref_slice %arg2[%26, %c0_i32_21] : memref<1024x128xf32, #tpu.memory_space<any>> -> memref<1x128xf32, #tpu.memory_space<any>>
      %c2_i32_22 = arith.constant 2 : i32
      %c0_i32_23 = arith.constant 0 : i32
      %28 = tpu.memref_slice %arg12[%c2_i32_22, %c0_i32_23] : memref<8x128xf32, #tpu.memory_space<vmem>> -> memref<1x128xf32, #tpu.memory_space<vmem>>
      %29 = tpu.memref_slice %arg16[%c2_i32] : memref<9x!tpu.dma_semaphore, #tpu.memory_space<semaphore_mem>> -> memref<1x!tpu.dma_semaphore, #tpu.memory_space<semaphore_mem>>
      %30 = tpu.memref_squeeze %29 : memref<1x!tpu.dma_semaphore, #tpu.memory_space<semaphore_mem>> -> memref<!tpu.dma_semaphore, #tpu.memory_space<semaphore_mem>>
      tpu.enqueue_dma source(%27 : memref<1x128xf32, #tpu.memory_space<any>>) target(%28 : memref<1x128xf32, #tpu.memory_space<vmem>>) target_semaphore(%30 : memref<!tpu.dma_semaphore, #tpu.memory_space<semaphore_mem>>)
      %c3 = arith.constant 3 : index
      %31 = memref.load %arg1[%c3] : memref<8xi32, #tpu.memory_space<smem>>
      %c0_i32_24 = arith.constant 0 : i32
      %c1023_i32_25 = arith.constant 1023 : i32
      %32 = arith.maxsi %c0_i32_24, %31 : i32
      %33 = arith.minsi %c1023_i32_25, %32 : i32
      %c3_i32 = arith.constant 3 : i32
      %c0_i32_26 = arith.constant 0 : i32
      %34 = tpu.memref_slice %arg2[%33, %c0_i32_26] : memref<1024x128xf32, #tpu.memory_space<any>> -> memref<1x128xf32, #tpu.memory_space<any>>
      %c3_i32_27 = arith.constant 3 : i32
      %c0_i32_28 = arith.constant 0 : i32
      %35 = tpu.memref_slice %arg12[%c3_i32_27, %c0_i32_28] : memref<8x128xf32, #tpu.memory_space<vmem>> -> memref<1x128xf32, #tpu.memory_space<vmem>>
      %36 = tpu.memref_slice %arg16[%c3_i32] : memref<9x!tpu.dma_semaphore, #tpu.memory_space<semaphore_mem>> -> memref<1x!tpu.dma_semaphore, #tpu.memory_space<semaphore_mem>>
      %37 = tpu.memref_squeeze %36 : memref<1x!tpu.dma_semaphore, #tpu.memory_space<semaphore_mem>> -> memref<!tpu.dma_semaphore, #tpu.memory_space<semaphore_mem>>
      tpu.enqueue_dma source(%34 : memref<1x128xf32, #tpu.memory_space<any>>) target(%35 : memref<1x128xf32, #tpu.memory_space<vmem>>) target_semaphore(%37 : memref<!tpu.dma_semaphore, #tpu.memory_space<semaphore_mem>>)
      %c4 = arith.constant 4 : index
      %38 = memref.load %arg1[%c4] : memref<8xi32, #tpu.memory_space<smem>>
      %c0_i32_29 = arith.constant 0 : i32
      %c1023_i32_30 = arith.constant 1023 : i32
      %39 = arith.maxsi %c0_i32_29, %38 : i32
      %40 = arith.minsi %c1023_i32_30, %39 : i32
      %c4_i32 = arith.constant 4 : i32
      %c0_i32_31 = arith.constant 0 : i32
      %41 = tpu.memref_slice %arg2[%40, %c0_i32_31] : memref<1024x128xf32, #tpu.memory_space<any>> -> memref<1x128xf32, #tpu.memory_space<any>>
      %c4_i32_32 = arith.constant 4 : i32
      %c0_i32_33 = arith.constant 0 : i32
      %42 = tpu.memref_slice %arg12[%c4_i32_32, %c0_i32_33] : memref<8x128xf32, #tpu.memory_space<vmem>> -> memref<1x128xf32, #tpu.memory_space<vmem>>
      %43 = tpu.memref_slice %arg16[%c4_i32] : memref<9x!tpu.dma_semaphore, #tpu.memory_space<semaphore_mem>> -> memref<1x!tpu.dma_semaphore, #tpu.memory_space<semaphore_mem>>
      %44 = tpu.memref_squeeze %43 : memref<1x!tpu.dma_semaphore, #tpu.memory_space<semaphore_mem>> -> memref<!tpu.dma_semaphore, #tpu.memory_space<semaphore_mem>>
      tpu.enqueue_dma source(%41 : memref<1x128xf32, #tpu.memory_space<any>>) target(%42 : memref<1x128xf32, #tpu.memory_space<vmem>>) target_semaphore(%44 : memref<!tpu.dma_semaphore, #tpu.memory_space<semaphore_mem>>)
      %c5 = arith.constant 5 : index
      %45 = memref.load %arg1[%c5] : memref<8xi32, #tpu.memory_space<smem>>
      %c0_i32_34 = arith.constant 0 : i32
      %c1023_i32_35 = arith.constant 1023 : i32
      %46 = arith.maxsi %c0_i32_34, %45 : i32
      %47 = arith.minsi %c1023_i32_35, %46 : i32
      %c5_i32 = arith.constant 5 : i32
      %c0_i32_36 = arith.constant 0 : i32
      %48 = tpu.memref_slice %arg2[%47, %c0_i32_36] : memref<1024x128xf32, #tpu.memory_space<any>> -> memref<1x128xf32, #tpu.memory_space<any>>
      %c5_i32_37 = arith.constant 5 : i32
      %c0_i32_38 = arith.constant 0 : i32
      %49 = tpu.memref_slice %arg12[%c5_i32_37, %c0_i32_38] : memref<8x128xf32, #tpu.memory_space<vmem>> -> memref<1x128xf32, #tpu.memory_space<vmem>>
      %50 = tpu.memref_slice %arg16[%c5_i32] : memref<9x!tpu.dma_semaphore, #tpu.memory_space<semaphore_mem>> -> memref<1x!tpu.dma_semaphore, #tpu.memory_space<semaphore_mem>>
      %51 = tpu.memref_squeeze %50 : memref<1x!tpu.dma_semaphore, #tpu.memory_space<semaphore_mem>> -> memref<!tpu.dma_semaphore, #tpu.memory_space<semaphore_mem>>
      tpu.enqueue_dma source(%48 : memref<1x128xf32, #tpu.memory_space<any>>) target(%49 : memref<1x128xf32, #tpu.memory_space<vmem>>) target_semaphore(%51 : memref<!tpu.dma_semaphore, #tpu.memory_space<semaphore_mem>>)
      %c6 = arith.constant 6 : index
      %52 = memref.load %arg1[%c6] : memref<8xi32, #tpu.memory_space<smem>>
      %c0_i32_39 = arith.constant 0 : i32
      %c1023_i32_40 = arith.constant 1023 : i32
      %53 = arith.maxsi %c0_i32_39, %52 : i32
      %54 = arith.minsi %c1023_i32_40, %53 : i32
      %c6_i32 = arith.constant 6 : i32
      %c0_i32_41 = arith.constant 0 : i32
      %55 = tpu.memref_slice %arg2[%54, %c0_i32_41] : memref<1024x128xf32, #tpu.memory_space<any>> -> memref<1x128xf32, #tpu.memory_space<any>>
      %c6_i32_42 = arith.constant 6 : i32
      %c0_i32_43 = arith.constant 0 : i32
      %56 = tpu.memref_slice %arg12[%c6_i32_42, %c0_i32_43] : memref<8x128xf32, #tpu.memory_space<vmem>> -> memref<1x128xf32, #tpu.memory_space<vmem>>
      %57 = tpu.memref_slice %arg16[%c6_i32] : memref<9x!tpu.dma_semaphore, #tpu.memory_space<semaphore_mem>> -> memref<1x!tpu.dma_semaphore, #tpu.memory_space<semaphore_mem>>
      %58 = tpu.memref_squeeze %57 : memref<1x!tpu.dma_semaphore, #tpu.memory_space<semaphore_mem>> -> memref<!tpu.dma_semaphore, #tpu.memory_space<semaphore_mem>>
      tpu.enqueue_dma source(%55 : memref<1x128xf32, #tpu.memory_space<any>>) target(%56 : memref<1x128xf32, #tpu.memory_space<vmem>>) target_semaphore(%58 : memref<!tpu.dma_semaphore, #tpu.memory_space<semaphore_mem>>)
      %c7 = arith.constant 7 : index
      %59 = memref.load %arg1[%c7] : memref<8xi32, #tpu.memory_space<smem>>
      %c0_i32_44 = arith.constant 0 : i32
      %c1023_i32_45 = arith.constant 1023 : i32
      %60 = arith.maxsi %c0_i32_44, %59 : i32
      %61 = arith.minsi %c1023_i32_45, %60 : i32
      %c7_i32 = arith.constant 7 : i32
      %c0_i32_46 = arith.constant 0 : i32
      %62 = tpu.memref_slice %arg2[%61, %c0_i32_46] : memref<1024x128xf32, #tpu.memory_space<any>> -> memref<1x128xf32, #tpu.memory_space<any>>
      %c7_i32_47 = arith.constant 7 : i32
      %c0_i32_48 = arith.constant 0 : i32
      %63 = tpu.memref_slice %arg12[%c7_i32_47, %c0_i32_48] : memref<8x128xf32, #tpu.memory_space<vmem>> -> memref<1x128xf32, #tpu.memory_space<vmem>>
      %64 = tpu.memref_slice %arg16[%c7_i32] : memref<9x!tpu.dma_semaphore, #tpu.memory_space<semaphore_mem>> -> memref<1x!tpu.dma_semaphore, #tpu.memory_space<semaphore_mem>>
      %65 = tpu.memref_squeeze %64 : memref<1x!tpu.dma_semaphore, #tpu.memory_space<semaphore_mem>> -> memref<!tpu.dma_semaphore, #tpu.memory_space<semaphore_mem>>
      tpu.enqueue_dma source(%62 : memref<1x128xf32, #tpu.memory_space<any>>) target(%63 : memref<1x128xf32, #tpu.memory_space<vmem>>) target_semaphore(%65 : memref<!tpu.dma_semaphore, #tpu.memory_space<semaphore_mem>>)
      %c8_i32 = arith.constant 8 : i32
      %66 = tpu.memref_slice %arg16[%c8_i32] : memref<9x!tpu.dma_semaphore, #tpu.memory_space<semaphore_mem>> -> memref<1x!tpu.dma_semaphore, #tpu.memory_space<semaphore_mem>>
      %67 = tpu.memref_squeeze %66 : memref<1x!tpu.dma_semaphore, #tpu.memory_space<semaphore_mem>> -> memref<!tpu.dma_semaphore, #tpu.memory_space<semaphore_mem>>
      tpu.enqueue_dma source(%arg3 : memref<2x256x512xbf16, #tpu.memory_space<any>>) target(%arg15 : memref<2x256x512xbf16, #tpu.memory_space<vmem>>) target_semaphore(%67 : memref<!tpu.dma_semaphore, #tpu.memory_space<semaphore_mem>>)
      %c0_i32_49 = arith.constant 0 : i32
      %c0_i32_50 = arith.constant 0 : i32
      %68 = tpu.memref_slice %arg2[%12, %c0_i32_50] : memref<1024x128xf32, #tpu.memory_space<any>> -> memref<1x128xf32, #tpu.memory_space<any>>
      %c0_i32_51 = arith.constant 0 : i32
      %c0_i32_52 = arith.constant 0 : i32
      %69 = tpu.memref_slice %arg12[%c0_i32_51, %c0_i32_52] : memref<8x128xf32, #tpu.memory_space<vmem>> -> memref<1x128xf32, #tpu.memory_space<vmem>>
      %70 = tpu.memref_slice %arg16[%c0_i32_49] : memref<9x!tpu.dma_semaphore, #tpu.memory_space<semaphore_mem>> -> memref<1x!tpu.dma_semaphore, #tpu.memory_space<semaphore_mem>>
      %71 = tpu.memref_squeeze %70 : memref<1x!tpu.dma_semaphore, #tpu.memory_space<semaphore_mem>> -> memref<!tpu.dma_semaphore, #tpu.memory_space<semaphore_mem>>
      tpu.wait_dma2 semaphore(%71 : memref<!tpu.dma_semaphore, #tpu.memory_space<semaphore_mem>>) src(%68 : memref<1x128xf32, #tpu.memory_space<any>>) dst(%69 : memref<1x128xf32, #tpu.memory_space<vmem>>)
      %c1_i32_53 = arith.constant 1 : i32
      %c0_i32_54 = arith.constant 0 : i32
      %72 = tpu.memref_slice %arg2[%19, %c0_i32_54] : memref<1024x128xf32, #tpu.memory_space<any>> -> memref<1x128xf32, #tpu.memory_space<any>>
      %c1_i32_55 = arith.constant 1 : i32
      %c0_i32_56 = arith.constant 0 : i32
      %73 = tpu.memref_slice %arg12[%c1_i32_55, %c0_i32_56] : memref<8x128xf32, #tpu.memory_space<vmem>> -> memref<1x128xf32, #tpu.memory_space<vmem>>
      %74 = tpu.memref_slice %arg16[%c1_i32_53] : memref<9x!tpu.dma_semaphore, #tpu.memory_space<semaphore_mem>> -> memref<1x!tpu.dma_semaphore, #tpu.memory_space<semaphore_mem>>
      %75 = tpu.memref_squeeze %74 : memref<1x!tpu.dma_semaphore, #tpu.memory_space<semaphore_mem>> -> memref<!tpu.dma_semaphore, #tpu.memory_space<semaphore_mem>>
      tpu.wait_dma2 semaphore(%75 : memref<!tpu.dma_semaphore, #tpu.memory_space<semaphore_mem>>) src(%72 : memref<1x128xf32, #tpu.memory_space<any>>) dst(%73 : memref<1x128xf32, #tpu.memory_space<vmem>>)
      %c2_i32_57 = arith.constant 2 : i32
      %c0_i32_58 = arith.constant 0 : i32
      %76 = tpu.memref_slice %arg2[%26, %c0_i32_58] : memref<1024x128xf32, #tpu.memory_space<any>> -> memref<1x128xf32, #tpu.memory_space<any>>
      %c2_i32_59 = arith.constant 2 : i32
      %c0_i32_60 = arith.constant 0 : i32
      %77 = tpu.memref_slice %arg12[%c2_i32_59, %c0_i32_60] : memref<8x128xf32, #tpu.memory_space<vmem>> -> memref<1x128xf32, #tpu.memory_space<vmem>>
      %78 = tpu.memref_slice %arg16[%c2_i32_57] : memref<9x!tpu.dma_semaphore, #tpu.memory_space<semaphore_mem>> -> memref<1x!tpu.dma_semaphore, #tpu.memory_space<semaphore_mem>>
      %79 = tpu.memref_squeeze %78 : memref<1x!tpu.dma_semaphore, #tpu.memory_space<semaphore_mem>> -> memref<!tpu.dma_semaphore, #tpu.memory_space<semaphore_mem>>
      tpu.wait_dma2 semaphore(%79 : memref<!tpu.dma_semaphore, #tpu.memory_space<semaphore_mem>>) src(%76 : memref<1x128xf32, #tpu.memory_space<any>>) dst(%77 : memref<1x128xf32, #tpu.memory_space<vmem>>)
      %c3_i32_61 = arith.constant 3 : i32
      %c0_i32_62 = arith.constant 0 : i32
      %80 = tpu.memref_slice %arg2[%33, %c0_i32_62] : memref<1024x128xf32, #tpu.memory_space<any>> -> memref<1x128xf32, #tpu.memory_space<any>>
      %c3_i32_63 = arith.constant 3 : i32
      %c0_i32_64 = arith.constant 0 : i32
      %81 = tpu.memref_slice %arg12[%c3_i32_63, %c0_i32_64] : memref<8x128xf32, #tpu.memory_space<vmem>> -> memref<1x128xf32, #tpu.memory_space<vmem>>
      %82 = tpu.memref_slice %arg16[%c3_i32_61] : memref<9x!tpu.dma_semaphore, #tpu.memory_space<semaphore_mem>> -> memref<1x!tpu.dma_semaphore, #tpu.memory_space<semaphore_mem>>
      %83 = tpu.memref_squeeze %82 : memref<1x!tpu.dma_semaphore, #tpu.memory_space<semaphore_mem>> -> memref<!tpu.dma_semaphore, #tpu.memory_space<semaphore_mem>>
      tpu.wait_dma2 semaphore(%83 : memref<!tpu.dma_semaphore, #tpu.memory_space<semaphore_mem>>) src(%80 : memref<1x128xf32, #tpu.memory_space<any>>) dst(%81 : memref<1x128xf32, #tpu.memory_space<vmem>>)
      %c4_i32_65 = arith.constant 4 : i32
      %c0_i32_66 = arith.constant 0 : i32
      %84 = tpu.memref_slice %arg2[%40, %c0_i32_66] : memref<1024x128xf32, #tpu.memory_space<any>> -> memref<1x128xf32, #tpu.memory_space<any>>
      %c4_i32_67 = arith.constant 4 : i32
      %c0_i32_68 = arith.constant 0 : i32
      %85 = tpu.memref_slice %arg12[%c4_i32_67, %c0_i32_68] : memref<8x128xf32, #tpu.memory_space<vmem>> -> memref<1x128xf32, #tpu.memory_space<vmem>>
      %86 = tpu.memref_slice %arg16[%c4_i32_65] : memref<9x!tpu.dma_semaphore, #tpu.memory_space<semaphore_mem>> -> memref<1x!tpu.dma_semaphore, #tpu.memory_space<semaphore_mem>>
      %87 = tpu.memref_squeeze %86 : memref<1x!tpu.dma_semaphore, #tpu.memory_space<semaphore_mem>> -> memref<!tpu.dma_semaphore, #tpu.memory_space<semaphore_mem>>
      tpu.wait_dma2 semaphore(%87 : memref<!tpu.dma_semaphore, #tpu.memory_space<semaphore_mem>>) src(%84 : memref<1x128xf32, #tpu.memory_space<any>>) dst(%85 : memref<1x128xf32, #tpu.memory_space<vmem>>)
      %c5_i32_69 = arith.constant 5 : i32
      %c0_i32_70 = arith.constant 0 : i32
      %88 = tpu.memref_slice %arg2[%47, %c0_i32_70] : memref<1024x128xf32, #tpu.memory_space<any>> -> memref<1x128xf32, #tpu.memory_space<any>>
      %c5_i32_71 = arith.constant 5 : i32
      %c0_i32_72 = arith.constant 0 : i32
      %89 = tpu.memref_slice %arg12[%c5_i32_71, %c0_i32_72] : memref<8x128xf32, #tpu.memory_space<vmem>> -> memref<1x128xf32, #tpu.memory_space<vmem>>
      %90 = tpu.memref_slice %arg16[%c5_i32_69] : memref<9x!tpu.dma_semaphore, #tpu.memory_space<semaphore_mem>> -> memref<1x!tpu.dma_semaphore, #tpu.memory_space<semaphore_mem>>
      %91 = tpu.memref_squeeze %90 : memref<1x!tpu.dma_semaphore, #tpu.memory_space<semaphore_mem>> -> memref<!tpu.dma_semaphore, #tpu.memory_space<semaphore_mem>>
      tpu.wait_dma2 semaphore(%91 : memref<!tpu.dma_semaphore, #tpu.memory_space<semaphore_mem>>) src(%88 : memref<1x128xf32, #tpu.memory_space<any>>) dst(%89 : memref<1x128xf32, #tpu.memory_space<vmem>>)
      %c6_i32_73 = arith.constant 6 : i32
      %c0_i32_74 = arith.constant 0 : i32
      %92 = tpu.memref_slice %arg2[%54, %c0_i32_74] : memref<1024x128xf32, #tpu.memory_space<any>> -> memref<1x128xf32, #tpu.memory_space<any>>
      %c6_i32_75 = arith.constant 6 : i32
      %c0_i32_76 = arith.constant 0 : i32
      %93 = tpu.memref_slice %arg12[%c6_i32_75, %c0_i32_76] : memref<8x128xf32, #tpu.memory_space<vmem>> -> memref<1x128xf32, #tpu.memory_space<vmem>>
      %94 = tpu.memref_slice %arg16[%c6_i32_73] : memref<9x!tpu.dma_semaphore, #tpu.memory_space<semaphore_mem>> -> memref<1x!tpu.dma_semaphore, #tpu.memory_space<semaphore_mem>>
      %95 = tpu.memref_squeeze %94 : memref<1x!tpu.dma_semaphore, #tpu.memory_space<semaphore_mem>> -> memref<!tpu.dma_semaphore, #tpu.memory_space<semaphore_mem>>
      tpu.wait_dma2 semaphore(%95 : memref<!tpu.dma_semaphore, #tpu.memory_space<semaphore_mem>>) src(%92 : memref<1x128xf32, #tpu.memory_space<any>>) dst(%93 : memref<1x128xf32, #tpu.memory_space<vmem>>)
      %c7_i32_77 = arith.constant 7 : i32
      %c0_i32_78 = arith.constant 0 : i32
      %96 = tpu.memref_slice %arg2[%61, %c0_i32_78] : memref<1024x128xf32, #tpu.memory_space<any>> -> memref<1x128xf32, #tpu.memory_space<any>>
      %c7_i32_79 = arith.constant 7 : i32
      %c0_i32_80 = arith.constant 0 : i32
      %97 = tpu.memref_slice %arg12[%c7_i32_79, %c0_i32_80] : memref<8x128xf32, #tpu.memory_space<vmem>> -> memref<1x128xf32, #tpu.memory_space<vmem>>
      %98 = tpu.memref_slice %arg16[%c7_i32_77] : memref<9x!tpu.dma_semaphore, #tpu.memory_space<semaphore_mem>> -> memref<1x!tpu.dma_semaphore, #tpu.memory_space<semaphore_mem>>
      %99 = tpu.memref_squeeze %98 : memref<1x!tpu.dma_semaphore, #tpu.memory_space<semaphore_mem>> -> memref<!tpu.dma_semaphore, #tpu.memory_space<semaphore_mem>>
      tpu.wait_dma2 semaphore(%99 : memref<!tpu.dma_semaphore, #tpu.memory_space<semaphore_mem>>) src(%96 : memref<1x128xf32, #tpu.memory_space<any>>) dst(%97 : memref<1x128xf32, #tpu.memory_space<vmem>>)
      %c0_81 = arith.constant 0 : index
      %c0_82 = arith.constant 0 : index
      %100 = vector.load %arg12[%c0_81, %c0_82] : memref<8x128xf32, #tpu.memory_space<vmem>>, vector<8x128xf32>
      %101 = arith.truncf %100 : vector<8x128xf32> to vector<8x128xbf16>
      %c0_83 = arith.constant 0 : index
      %c0_84 = arith.constant 0 : index
      %102 = vector.load %arg13[%c0_83, %c0_84] : memref<8x256xbf16, #tpu.memory_space<vmem>>, vector<8x128xbf16>
      tpu.vector_store %arg13[%c0_83, %c0_84], %101 {strides = array<i32>} : memref<8x256xbf16, #tpu.memory_space<vmem>>, vector<8x128xbf16>,
      %c8_i32_85 = arith.constant 8 : i32
      %103 = tpu.memref_slice %arg16[%c8_i32_85] : memref<9x!tpu.dma_semaphore, #tpu.memory_space<semaphore_mem>> -> memref<1x!tpu.dma_semaphore, #tpu.memory_space<semaphore_mem>>
      %104 = tpu.memref_squeeze %103 : memref<1x!tpu.dma_semaphore, #tpu.memory_space<semaphore_mem>> -> memref<!tpu.dma_semaphore, #tpu.memory_space<semaphore_mem>>
      tpu.wait_dma2 semaphore(%104 : memref<!tpu.dma_semaphore, #tpu.memory_space<semaphore_mem>>) src(%arg3 : memref<2x256x512xbf16, #tpu.memory_space<any>>) dst(%arg15 : memref<2x256x512xbf16, #tpu.memory_space<vmem>>)
      %c0_86 = arith.constant 0 : index
      %c0_87 = arith.constant 0 : index
      %c0_88 = arith.constant 0 : index
      %105 = vector.load %arg4[%c0_86, %c0_87, %c0_88] : memref<2x8x128xf32, #tpu.memory_space<vmem>>, vector<1x8x128xf32>
      %106 = vector.shape_cast %105 : vector<1x8x128xf32> to vector<8x128xf32>
      %c0_89 = arith.constant 0 : index
      %c0_90 = arith.constant 0 : index
      %c0_91 = arith.constant 0 : index
      %107 = vector.load %arg5[%c0_89, %c0_90, %c0_91] : memref<2x8x128xf32, #tpu.memory_space<vmem>>, vector<1x8x128xf32>
      %108 = vector.shape_cast %107 : vector<1x8x128xf32> to vector<8x128xf32>
      %109 = arith.truncf %106 : vector<8x128xf32> to vector<8x128xbf16>
      %c0_92 = arith.constant 0 : index
      %c128 = arith.constant 128 : index
      %110 = vector.load %arg13[%c0_92, %c128] : memref<8x256xbf16, #tpu.memory_space<vmem>>, vector<8x128xbf16>
      tpu.vector_store %arg13[%c0_92, %c128], %109 {strides = array<i32>} : memref<8x256xbf16, #tpu.memory_space<vmem>>, vector<8x128xbf16>,
      %c0_93 = arith.constant 0 : index
      %c0_94 = arith.constant 0 : index
      %111 = vector.load %arg13[%c0_93, %c0_94] : memref<8x256xbf16, #tpu.memory_space<vmem>>, vector<8x256xbf16>
      %c0_95 = arith.constant 0 : index
      %c0_96 = arith.constant 0 : index
      %c0_97 = arith.constant 0 : index
      %112 = vector.load %arg15[%c0_95, %c0_96, %c0_97] : memref<2x256x512xbf16, #tpu.memory_space<vmem>>, vector<1x256x512xbf16>
      %113 = vector.shape_cast %112 : vector<1x256x512xbf16> to vector<256x512xbf16>
      %cst_98 = arith.constant dense<0.000000e+00> : vector<8x512xf32>
      %114 = tpu.matmul %111, %113, %cst_98 {dimension_numbers = #tpu.dot_dimension_numbers<[1], [0], [0], [1], [0, 0, 1, 1], [], []>} : vector<8x256xbf16>, vector<256x512xbf16>, vector<8x512xf32> -> vector<8x512xf32>
      %c0_99 = arith.constant 0 : index
      %c0_100 = arith.constant 0 : index
      %c0_101 = arith.constant 0 : index
      %115 = vector.load %arg6[%c0_99, %c0_100, %c0_101] : memref<2x1x512xf32, #tpu.memory_space<vmem>>, vector<1x1x512xf32>
      %116 = vector.shape_cast %115 : vector<1x1x512xf32> to vector<1x512xf32>
      %117 = vector.broadcast %116 : vector<1x512xf32> to vector<8x512xf32>
      %118 = arith.addf %114, %117 : vector<8x512xf32>
      %119 = vector.extract_strided_slice %118 {offsets = [0, 0], sizes = [8, 384], strides = [1, 1]} : vector<8x512xf32> to vector<8x384xf32>
      %120 = arith.negf %119 : vector<8x384xf32>
      %121 = math.exp %120 : vector<8x384xf32>
      %cst_102 = arith.constant 1.000000e+00 : f32
      %122 = vector.broadcast %cst_102 : f32 to vector<8x384xf32>
      %123 = arith.addf %122, %121 : vector<8x384xf32>
      %124 = arith.divf %122, %123 : vector<8x384xf32>
      %125 = vector.extract_strided_slice %124 {offsets = [0, 0], sizes = [8, 128], strides = [1, 1]} : vector<8x384xf32> to vector<8x128xf32>
      %126 = vector.extract_strided_slice %124 {offsets = [0, 128], sizes = [8, 128], strides = [1, 1]} : vector<8x384xf32> to vector<8x128xf32>
      %127 = vector.extract_strided_slice %124 {offsets = [0, 256], sizes = [8, 128], strides = [1, 1]} : vector<8x384xf32> to vector<8x128xf32>
      %128 = vector.extract_strided_slice %118 {offsets = [0, 384], sizes = [8, 128], strides = [1, 1]} : vector<8x512xf32> to vector<8x128xf32>
      %129 = math.tanh %128 : vector<8x128xf32>
      %130 = arith.mulf %126, %108 : vector<8x128xf32>
      %131 = arith.mulf %125, %129 : vector<8x128xf32>
      %132 = arith.addf %130, %131 : vector<8x128xf32>
      %133 = math.tanh %132 : vector<8x128xf32>
      %134 = arith.mulf %127, %133 : vector<8x128xf32>
      %c0_103 = arith.constant 0 : index
      %c0_104 = arith.constant 0 : index
      %c0_105 = arith.constant 0 : index
      %135 = vector.load %arg10[%c0_103, %c0_104, %c0_105] : memref<2x8x128xf32, #tpu.memory_space<vmem>>, vector<1x8x128xf32>
      %136 = vector.shape_cast %135 : vector<1x8x128xf32> to vector<8x128xf32>
      %137 = vector.shape_cast %134 : vector<8x128xf32> to vector<1x8x128xf32>
      tpu.vector_store %arg10[%c0_103, %c0_104, %c0_105], %137 {strides = array<i32>} : memref<2x8x128xf32, #tpu.memory_space<vmem>>, vector<1x8x128xf32>,
      %c0_106 = arith.constant 0 : index
      %c0_107 = arith.constant 0 : index
      %c0_108 = arith.constant 0 : index
      %138 = vector.load %arg11[%c0_106, %c0_107, %c0_108] : memref<2x8x128xf32, #tpu.memory_space<vmem>>, vector<1x8x128xf32>
      %139 = vector.shape_cast %138 : vector<1x8x128xf32> to vector<8x128xf32>
      %140 = vector.shape_cast %132 : vector<8x128xf32> to vector<1x8x128xf32>
      tpu.vector_store %arg11[%c0_106, %c0_107, %c0_108], %140 {strides = array<i32>} : memref<2x8x128xf32, #tpu.memory_space<vmem>>, vector<1x8x128xf32>,
      %141 = arith.truncf %134 : vector<8x128xf32> to vector<8x128xbf16>
      %c0_109 = arith.constant 0 : index
      %c0_110 = arith.constant 0 : index
      %142 = vector.load %arg13[%c0_109, %c0_110] : memref<8x256xbf16, #tpu.memory_space<vmem>>, vector<8x128xbf16>
      tpu.vector_store %arg13[%c0_109, %c0_110], %141 {strides = array<i32>} : memref<8x256xbf16, #tpu.memory_space<vmem>>, vector<8x128xbf16>,
      %c1_111 = arith.constant 1 : index
      %c0_112 = arith.constant 0 : index
      %c0_113 = arith.constant 0 : index
      %143 = vector.load %arg4[%c1_111, %c0_112, %c0_113] : memref<2x8x128xf32, #tpu.memory_space<vmem>>, vector<1x8x128xf32>
      %144 = vector.shape_cast %143 : vector<1x8x128xf32> to vector<8x128xf32>
      %c1_114 = arith.constant 1 : index
      %c0_115 = arith.constant 0 : index
      %c0_116 = arith.constant 0 : index
      %145 = vector.load %arg5[%c1_114, %c0_115, %c0_116] : memref<2x8x128xf32, #tpu.memory_space<vmem>>, vector<1x8x128xf32>
      %146 = vector.shape_cast %145 : vector<1x8x128xf32> to vector<8x128xf32>
      %147 = arith.truncf %144 : vector<8x128xf32> to vector<8x128xbf16>
      %c0_117 = arith.constant 0 : index
      %c128_118 = arith.constant 128 : index
      %148 = vector.load %arg13[%c0_117, %c128_118] : memref<8x256xbf16, #tpu.memory_space<vmem>>, vector<8x128xbf16>
      tpu.vector_store %arg13[%c0_117, %c128_118], %147 {strides = array<i32>} : memref<8x256xbf16, #tpu.memory_space<vmem>>, vector<8x128xbf16>,
      %c0_119 = arith.constant 0 : index
      %c0_120 = arith.constant 0 : index
      %149 = vector.load %arg13[%c0_119, %c0_120] : memref<8x256xbf16, #tpu.memory_space<vmem>>, vector<8x256xbf16>
      %c1_121 = arith.constant 1 : index
      %c0_122 = arith.constant 0 : index
      %c0_123 = arith.constant 0 : index
      %150 = vector.load %arg15[%c1_121, %c0_122, %c0_123] : memref<2x256x512xbf16, #tpu.memory_space<vmem>>, vector<1x256x512xbf16>
      %151 = vector.shape_cast %150 : vector<1x256x512xbf16> to vector<256x512xbf16>
      %cst_124 = arith.constant dense<0.000000e+00> : vector<8x512xf32>
      %152 = tpu.matmul %149, %151, %cst_124 {dimension_numbers = #tpu.dot_dimension_numbers<[1], [0], [0], [1], [0, 0, 1, 1], [], []>} : vector<8x256xbf16>, vector<256x512xbf16>, vector<8x512xf32> -> vector<8x512xf32>
      %c1_125 = arith.constant 1 : index
      %c0_126 = arith.constant 0 : index
      %c0_127 = arith.constant 0 : index
      %153 = vector.load %arg6[%c1_125, %c0_126, %c0_127] : memref<2x1x512xf32, #tpu.memory_space<vmem>>, vector<1x1x512xf32>
      %154 = vector.shape_cast %153 : vector<1x1x512xf32> to vector<1x512xf32>
      %155 = vector.broadcast %154 : vector<1x512xf32> to vector<8x512xf32>
      %156 = arith.addf %152, %155 : vector<8x512xf32>
      %157 = vector.extract_strided_slice %156 {offsets = [0, 0], sizes = [8, 384], strides = [1, 1]} : vector<8x512xf32> to vector<8x384xf32>
      %158 = arith.negf %157 : vector<8x384xf32>
      %159 = math.exp %158 : vector<8x384xf32>
      %cst_128 = arith.constant 1.000000e+00 : f32
      %160 = vector.broadcast %cst_128 : f32 to vector<8x384xf32>
      %161 = arith.addf %160, %159 : vector<8x384xf32>
      %162 = arith.divf %160, %161 : vector<8x384xf32>
      %163 = vector.extract_strided_slice %162 {offsets = [0, 0], sizes = [8, 128], strides = [1, 1]} : vector<8x384xf32> to vector<8x128xf32>
      %164 = vector.extract_strided_slice %162 {offsets = [0, 128], sizes = [8, 128], strides = [1, 1]} : vector<8x384xf32> to vector<8x128xf32>
      %165 = vector.extract_strided_slice %162 {offsets = [0, 256], sizes = [8, 128], strides = [1, 1]} : vector<8x384xf32> to vector<8x128xf32>
      %166 = vector.extract_strided_slice %156 {offsets = [0, 384], sizes = [8, 128], strides = [1, 1]} : vector<8x512xf32> to vector<8x128xf32>
      %167 = math.tanh %166 : vector<8x128xf32>
      %168 = arith.mulf %164, %146 : vector<8x128xf32>
      %169 = arith.mulf %163, %167 : vector<8x128xf32>
      %170 = arith.addf %168, %169 : vector<8x128xf32>
      %171 = math.tanh %170 : vector<8x128xf32>
      %172 = arith.mulf %165, %171 : vector<8x128xf32>
      %c1_129 = arith.constant 1 : index
      %c0_130 = arith.constant 0 : index
      %c0_131 = arith.constant 0 : index
      %173 = vector.load %arg10[%c1_129, %c0_130, %c0_131] : memref<2x8x128xf32, #tpu.memory_space<vmem>>, vector<1x8x128xf32>
      %174 = vector.shape_cast %173 : vector<1x8x128xf32> to vector<8x128xf32>
      %175 = vector.shape_cast %172 : vector<8x128xf32> to vector<1x8x128xf32>
      tpu.vector_store %arg10[%c1_129, %c0_130, %c0_131], %175 {strides = array<i32>} : memref<2x8x128xf32, #tpu.memory_space<vmem>>, vector<1x8x128xf32>,
      %c1_132 = arith.constant 1 : index
      %c0_133 = arith.constant 0 : index
      %c0_134 = arith.constant 0 : index
      %176 = vector.load %arg11[%c1_132, %c0_133, %c0_134] : memref<2x8x128xf32, #tpu.memory_space<vmem>>, vector<1x8x128xf32>
      %177 = vector.shape_cast %176 : vector<1x8x128xf32> to vector<8x128xf32>
      %178 = vector.shape_cast %170 : vector<8x128xf32> to vector<1x8x128xf32>
      tpu.vector_store %arg11[%c1_132, %c0_133, %c0_134], %178 {strides = array<i32>} : memref<2x8x128xf32, #tpu.memory_space<vmem>>, vector<1x8x128xf32>,
      %179 = arith.truncf %172 : vector<8x128xf32> to vector<8x128xbf16>
      %c0_135 = arith.constant 0 : index
      %c0_136 = arith.constant 0 : index
      %180 = vector.load %arg13[%c0_135, %c0_136] : memref<8x256xbf16, #tpu.memory_space<vmem>>, vector<8x128xbf16>
      tpu.vector_store %arg13[%c0_135, %c0_136], %179 {strides = array<i32>} : memref<8x256xbf16, #tpu.memory_space<vmem>>, vector<8x128xbf16>,
      %c0_137 = arith.constant 0 : index
      %c0_138 = arith.constant 0 : index
      %181 = vector.load %arg13[%c0_137, %c0_138] : memref<8x256xbf16, #tpu.memory_space<vmem>>, vector<8x128xbf16>
      %c0_139 = arith.constant 0 : index
      %c0_140 = arith.constant 0 : index
      %182 = vector.load %arg14[%c0_139, %c0_140] : memref<8x128xbf16, #tpu.memory_space<vmem>>, vector<8x128xbf16>
      tpu.vector_store %arg14[%c0_139, %c0_140], %181 {strides = array<i32>} : memref<8x128xbf16, #tpu.memory_space<vmem>>, vector<8x128xbf16>,
    } else {
    }
    %c0 = arith.constant 0 : index
    %c0_1 = arith.constant 0 : index
    %3 = vector.load %arg14[%c0, %c0_1] : memref<8x128xbf16, #tpu.memory_space<vmem>>, vector<8x128xbf16>
    %c0_2 = arith.constant 0 : index
    %c0_3 = arith.constant 0 : index
    %4 = vector.load %arg7[%c0_2, %c0_3] : memref<128x512xbf16, #tpu.memory_space<vmem>>, vector<128x512xbf16>
    %cst = arith.constant dense<0.000000e+00> : vector<8x512xf32>
    %5 = tpu.matmul %3, %4, %cst {dimension_numbers = #tpu.dot_dimension_numbers<[1], [0], [0], [1], [0, 0, 1, 1], [], []>} : vector<8x128xbf16>, vector<128x512xbf16>, vector<8x512xf32> -> vector<8x512xf32>
    %c0_4 = arith.constant 0 : index
    %c0_5 = arith.constant 0 : index
    %6 = vector.load %arg8[%c0_4, %c0_5] : memref<1x512xf32, #tpu.memory_space<vmem>>, vector<1x512xf32>
    %7 = vector.broadcast %6 : vector<1x512xf32> to vector<8x512xf32>
    %8 = arith.addf %5, %7 : vector<8x512xf32>
    %c0_6 = arith.constant 0 : index
    %c0_7 = arith.constant 0 : index
    %9 = vector.load %arg9[%c0_6, %c0_7] : memref<8x512xf32, #tpu.memory_space<vmem>>, vector<8x512xf32>
    tpu.vector_store %arg9[%c0_6, %c0_7], %8 {strides = array<i32>} : memref<8x512xf32, #tpu.memory_space<vmem>>, vector<8x512xf32>,
    return
  }
  func.func @transform_0(%arg0: i32) -> i32 {
    %c0_i32 = arith.constant 0 : i32
    %c0_i32_0 = arith.constant 0 : i32
    return %c0_i32 : i32
  }
  func.func @transform_3(%arg0: i32) -> (i32, i32, i32) {
    %c0_i32 = arith.constant 0 : i32
    %c0_i32_0 = arith.constant 0 : i32
    %c0_i32_1 = arith.constant 0 : i32
    %c0_i32_2 = arith.constant 0 : i32
    return %c0_i32, %c0_i32_0, %c0_i32_1 : i32, i32, i32
  }
  func.func @transform_4(%arg0: i32) -> (i32, i32, i32) {
    %c0_i32 = arith.constant 0 : i32
    %c0_i32_0 = arith.constant 0 : i32
    %c0_i32_1 = arith.constant 0 : i32
    %c0_i32_2 = arith.constant 0 : i32
    return %c0_i32, %c0_i32_0, %c0_i32_1 : i32, i32, i32
  }
  func.func @transform_5(%arg0: i32) -> (i32, i32, i32) {
    %c0_i32 = arith.constant 0 : i32
    %c0_i32_0 = arith.constant 0 : i32
    %c0_i32_1 = arith.constant 0 : i32
    %c0_i32_2 = arith.constant 0 : i32
    return %c0_i32, %c0_i32_0, %c0_i32_1 : i32, i32, i32
  }
  func.func @transform_6(%arg0: i32) -> (i32, i32) {
    %c0_i32 = arith.constant 0 : i32
    %c0_i32_0 = arith.constant 0 : i32
    return %c0_i32, %arg0 : i32, i32
  }
  func.func @transform_7(%arg0: i32) -> (i32, i32) {
    %c0_i32 = arith.constant 0 : i32
    %c0_i32_0 = arith.constant 0 : i32
    return %c0_i32, %arg0 : i32, i32
  }
  func.func @transform_8(%arg0: i32) -> (i32, i32) {
    %c0_i32 = arith.constant 0 : i32
    %c0_i32_0 = arith.constant 0 : i32
    return %c0_i32, %arg0 : i32, i32
  }
  func.func @transform_9(%arg0: i32) -> (i32, i32, i32) {
    %c0_i32 = arith.constant 0 : i32
    %c0_i32_0 = arith.constant 0 : i32
    %c0_i32_1 = arith.constant 0 : i32
    %c0_i32_2 = arith.constant 0 : i32
    return %c0_i32, %c0_i32_0, %c0_i32_1 : i32, i32, i32
  }
  func.func @transform_10(%arg0: i32) -> (i32, i32, i32) {
    %c0_i32 = arith.constant 0 : i32
    %c0_i32_0 = arith.constant 0 : i32
    %c0_i32_1 = arith.constant 0 : i32
    %c0_i32_2 = arith.constant 0 : i32
    return %c0_i32, %c0_i32_0, %c0_i32_1 : i32, i32, i32
  }
}

</mosaic_0001>

<llo_original>
// kernel: tpu_custom_call.1
$region0: #{tpu_custom_call.1}
  #allocation0 [shape = 'u32[]', space=smem, size = 0x4, offset = 0x4, fixed_abs, tag = 'smem constant byte address 0x4 - core index']
  #allocation1 [shape = 'u32[72,128]{1,0:T(1,128)}', space=vmem, size = 0x9000, scoped, tag = 'internal scratch']
  #allocation2 [shape = 'f32[8,128]{1,0:T(8,128)}', space=vmem, size = 0x1000, scoped, tag = 'scratch operand']
  #allocation3 [shape = 'bf16[8,256]{1,0:T(8,128)(2,1)}', space=vmem, size = 0x1000, scoped, tag = 'scratch operand']
  #allocation4 [shape = 'bf16[8,128]{1,0:T(8,128)(2,1)}', space=vmem, size = 0x800, scoped, tag = 'scratch operand']
  #allocation5 [shape = 'bf16[2,256,512]{2,1,0:T(8,128)(2,1)}', space=vmem, size = 0x80000, scoped, tag = 'scratch operand']
  #allocation6 [shape = 's32[9]{0}', space=sflag, size = 0x24, scoped, tag = 'scratch operand']
  #allocation22 [shape = 's32[]', space=sflag, size = 0x4, offset = 0, fixed_abs, tag = 'sflag constant byte address 0x0 - dummy sync flag']
  #allocation23 [shape = 's32[]', space=sflag, size = 0x4, offset = 0, fixed_abs, tag = 'sflag constant byte address 0x0 - dummy sync flag']
  #allocation24 [shape = 'u32[]', space=smem, size = 0x4, offset = 0x44, fixed_abs, tag = 'smem constant byte address 0x44 - assertion arg 0']
  #allocation25 [shape = 'u32[]', space=smem, size = 0x4, offset = 0x48, fixed_abs, tag = 'smem constant byte address 0x48 - assertion arg 1']
  #allocation26 [shape = 's32[]', space=sflag, size = 0x4, offset = 0, fixed_abs, tag = 'sflag constant byte address 0x0 - dummy sync flag']
  #allocation27 [shape = 's32[]', space=sflag, size = 0x4, offset = 0, fixed_abs, tag = 'sflag constant byte address 0x0 - dummy sync flag']
  #allocation28 [shape = 's32[]', space=sflag, size = 0x4, offset = 0, fixed_abs, tag = 'sflag constant byte address 0x0 - dummy sync flag']
  #allocation29 [shape = 's32[]', space=sflag, size = 0x4, offset = 0, fixed_abs, tag = 'sflag constant byte address 0x0 - dummy sync flag']
  #allocation30 [shape = 's32[]', space=sflag, size = 0x4, offset = 0, fixed_abs, tag = 'sflag constant byte address 0x0 - dummy sync flag']
  #allocation31 [shape = 's32[]', space=sflag, size = 0x4, offset = 0, fixed_abs, tag = 'sflag constant byte address 0x0 - dummy sync flag']
  #allocation32 [shape = 's32[]', space=sflag, size = 0x4, offset = 0, fixed_abs, tag = 'sflag constant byte address 0x0 - dummy sync flag']
  #allocation33 [shape = 's32[]', space=sflag, size = 0x4, offset = 0, fixed_abs, tag = 'sflag constant byte address 0x0 - dummy sync flag']
  #allocation34 [shape = 's32[]', space=sflag, size = 0x4, offset = 0, fixed_abs, tag = 'sflag constant byte address 0x0 - dummy sync flag']
  #allocation35 [shape = 's32[]', space=sflag, size = 0x4, offset = 0, fixed_abs, tag = 'sflag constant byte address 0x0 - dummy sync flag']
  #allocation36 [shape = 's32[]', space=sflag, size = 0x4, offset = 0, fixed_abs, tag = 'sflag constant byte address 0x0 - dummy sync flag']
  #allocation37 [shape = 's32[]', space=sflag, size = 0x4, offset = 0, fixed_abs, tag = 'sflag constant byte address 0x0 - dummy sync flag']
  #allocation38 [shape = 's32[]', space=sflag, size = 0x4, offset = 0, fixed_abs, tag = 'sflag constant byte address 0x0 - dummy sync flag']
  #allocation39 [shape = 's32[]', space=sflag, size = 0x4, offset = 0, fixed_abs, tag = 'sflag constant byte address 0x0 - dummy sync flag']
  #allocation40 [shape = 's32[]', space=sflag, size = 0x4, offset = 0, fixed_abs, tag = 'sflag constant byte address 0x0 - dummy sync flag']
  #allocation41 [shape = 's32[]', space=sflag, size = 0x4, offset = 0, fixed_abs, tag = 'sflag constant byte address 0x0 - dummy sync flag']
  %s0 = inlined_call_operand.hbm [shape: s32[8], index: 0, kind: input, shape index: {}]
  %s1 = inlined_call_operand.hbm [shape: f32[1024,128], index: 1, kind: input, shape index: {}]
  %s2 = inlined_call_operand.hbm [shape: bf16[2,256,512], index: 2, kind: input, shape index: {}]
  %s3 = inlined_call_operand.hbm [shape: f32[2,8,128], index: 3, kind: input, shape index: {}]
  %s4 = inlined_call_operand.hbm [shape: f32[2,8,128], index: 4, kind: input, shape index: {}]
  %s5 = inlined_call_operand.hbm [shape: f32[2,1,512], index: 5, kind: input, shape index: {}]
  %s6 = inlined_call_operand.hbm [shape: bf16[128,1024], index: 6, kind: input, shape index: {}]
  %s7 = inlined_call_operand.hbm [shape: f32[1,1024], index: 7, kind: input, shape index: {}]
  %s8 = inlined_call_operand.hbm [shape: f32[8,1024], index: 8, kind: output, shape index: {0}]
  %s9 = inlined_call_operand.hbm [shape: f32[2,8,128], index: 9, kind: output, shape index: {1}]
  %s10 = inlined_call_operand.hbm [shape: f32[2,8,128], index: 10, kind: output, shape index: {2}]
  %11 = xla_tuple %s8, %s9, %s10
  %s12 = sld [smem:[#allocation0]]
  $region137: #{tpu_custom_call.1} parent=0
    _
  %s14 = ssub.s32 1, %s12
  %s15 = scalar_select 0, %s14, %s12
  $region1: #{tpu_custom_call.1} parent=0
    #allocation7 [shape = 'u8[512]{0}', space=smem, size = 0x200, scoped, tag = 'input window, operand 0, single buffered']
    #allocation8 [shape = 's32[2]{0}', space=sflag, size = 0x8, scoped, tag = 'scoped memory for tpu_custom_call.1']
    #allocation9 [shape = 's32[2]{0}', space=sflag, size = 0x8, scoped, tag = 'scoped memory for tpu_custom_call.1']
    #allocation10 [shape = 's32[2]{0}', space=sflag, size = 0x8, scoped, tag = 'scoped memory for tpu_custom_call.1']
    #allocation11 [shape = 'u8[8192]{0}', space=vmem, size = 0x2000, scoped, tag = 'input window, operand 3, single buffered']
    #allocation12 [shape = 'u8[8192]{0}', space=vmem, size = 0x2000, scoped, tag = 'input window, operand 4, single buffered']
    #allocation13 [shape = 's32[1]{0}', space=sflag, size = 0x4, scoped, tag = 'scoped memory for tpu_custom_call.1']
    #allocation14 [shape = 'u8[4096]{0}', space=vmem, size = 0x1000, scoped, tag = 'input window, operand 5, single buffered']
    #allocation15 [shape = 'u8[262144]{0}', space=vmem, size = 0x40000, scoped, tag = 'input window, operand 6']
    #allocation16 [shape = 's32[2]{0}', space=sflag, size = 0x8, scoped, tag = 'scoped memory for tpu_custom_call.1']
    #allocation17 [shape = 'u8[4096]{0}', space=vmem, size = 0x1000, scoped, tag = 'input window, operand 7']
    #allocation18 [shape = 'u8[32768]{0}', space=vmem, size = 0x8000, scoped, tag = 'output window, operand 0']
    #allocation19 [shape = 'u8[8192]{0}', space=vmem, size = 0x2000, scoped, tag = 'output window, operand 1, single buffered']
    #allocation20 [shape = 's32[1]{0}', space=sflag, size = 0x4, scoped, tag = 'scoped memory for tpu_custom_call.1']
    #allocation21 [shape = 'u8[8192]{0}', space=vmem, size = 0x2000, scoped, tag = 'output window, operand 2, single buffered']
    %16 = vsyncpa [#allocation10], 0
    %17 = vsyncpa [#allocation8], 0
    %18 = vsyncpa [#allocation13], 0
    %19 = vsyncpa [#allocation16], 0
    %s20 = scalar_lea.sflag [#allocation16], 1
    %21 = vsyncpa %s20, 0
    %22 = vsyncpa [#allocation9], 0
    %s23 = scalar_lea.sflag [#allocation9], 1
    %24 = vsyncpa %s23, 0
    %25 = vsyncpa [#allocation20], 0
    loop: start=0, step=1, limit=4
    $region2: #{tpu_custom_call.1} parent=1 // loop_pre_header
      _
    $region3: #{tpu_custom_call.1} parent=1 // loop_header
      %s27 = sphi 0, %s31
      %p28 = scmp.ge.s32.totalorder %s27, 4
      %s35 = sphi 0, %s35
      %s37 = sphi 0, %s35
      %s38 = sphi 0, %s37
      %s52 = sphi 0, %s38
      %s56 = sphi 0, %s56
      %s58 = sphi 0, %s56
      %s59 = sphi 0, %s58
      %s73 = sphi 0, %s59
      %s77 = sphi 0, %s77
      %s79 = sphi 0, %s77
      %s80 = sphi 0, %s79
      %s94 = sphi 0, %s80
      %s98 = sphi 0, %s98
      %s100 = sphi 0, %s98
      %s101 = sphi 0, %s100
      %s115 = sphi 0, %s101
      %s121 = sphi 0, %s123
      %s124 = sphi 0, %s121
      %s125 = sphi 0, %s124
      %s141 = sphi 0, %s125
      %s147 = sphi 0, %s149
      %s150 = sphi 0, %s147
      %s151 = sphi 0, %s150
      %s167 = sphi 0, %s151
      %s173 = sphi 0, %s175
      %s176 = sphi 0, %s173
      %s177 = sphi 0, %s176
      %s193 = sphi 0, %s177
      %s197 = sphi 0, %s197
      %s199 = sphi 0, %s197
      %s200 = sphi 0, %s199
      %s214 = sphi 0, %s200
      %s218 = sphi 0, %s218
      %s220 = sphi 0, %s218
      %s221 = sphi 0, %s220
      %s235 = sphi 0, %s221
    $region4: #{tpu_custom_call.1} parent=1 // loop_header_branch
      %30 = sbr.rel (%p28) target = $region8
    $region5: #{tpu_custom_call.1} parent=1 // loop_body
      %s32 = ssub.s32 %s27, 1
      %s33 = ssub.s32 %s27, 2
      %s34 = sadd.s32 %s27, 1
      %s36 = sadd.s32 %s35, 1
      %p39 = scmp.eq.s32.totalorder %s27, 1
      %p40 = scmp.ne.s32.totalorder %s35, %s37
      %p41 = scmp.eq.s32.totalorder %s27, 0
      %p42 = por %p40, %p41
      %p43 = scmp.ne.s32.totalorder %s35, %s37
      %p44 = scmp.eq.s32.totalorder %s32, 1
      %p45 = por %p43, %p44
      %p46 = scmp.ne.s32.totalorder %s37, %s38
      %p47 = scmp.eq.s32.totalorder %s32, 0
      %p48 = por %p46, %p47
      %p49 = scmp.ne.s32.totalorder %s37, %s38
      %p50 = scmp.eq.s32.totalorder %s33, 1
      %p51 = por %p49, %p50
      %p53 = scmp.ne.s32.totalorder %s38, %s52
      %p54 = scmp.eq.s32.totalorder %s33, 0
      %p55 = por %p53, %p54
      %s57 = sadd.s32 %s56, 1
      %p60 = scmp.eq.s32.totalorder %s27, 1
      %p61 = scmp.ne.s32.totalorder %s56, %s58
      %p62 = scmp.eq.s32.totalorder %s27, 0
      %p63 = por %p61, %p62
      %p64 = scmp.ne.s32.totalorder %s56, %s58
      %p65 = scmp.eq.s32.totalorder %s32, 1
      %p66 = por %p64, %p65
      %p67 = scmp.ne.s32.totalorder %s58, %s59
      %p68 = scmp.eq.s32.totalorder %s32, 0
      %p69 = por %p67, %p68
      %p70 = scmp.ne.s32.totalorder %s58, %s59
      %p71 = scmp.eq.s32.totalorder %s33, 1
      %p72 = por %p70, %p71
      %p74 = scmp.ne.s32.totalorder %s59, %s73
      %p75 = scmp.eq.s32.totalorder %s33, 0
      %p76 = por %p74, %p75
      %s78 = sadd.s32 %s77, 1
      %p81 = scmp.eq.s32.totalorder %s27, 1
      %p82 = scmp.ne.s32.totalorder %s77, %s79
      %p83 = scmp.eq.s32.totalorder %s27, 0
      %p84 = por %p82, %p83
      %p85 = scmp.ne.s32.totalorder %s77, %s79
      %p86 = scmp.eq.s32.totalorder %s32, 1
      %p87 = por %p85, %p86
      %p88 = scmp.ne.s32.totalorder %s79, %s80
      %p89 = scmp.eq.s32.totalorder %s32, 0
      %p90 = por %p88, %p89
      %p91 = scmp.ne.s32.totalorder %s79, %s80
      %p92 = scmp.eq.s32.totalorder %s33, 1
      %p93 = por %p91, %p92
      %p95 = scmp.ne.s32.totalorder %s80, %s94
      %p96 = scmp.eq.s32.totalorder %s33, 0
      %p97 = por %p95, %p96
      %s99 = sadd.s32 %s98, 1
      %p102 = scmp.eq.s32.totalorder %s27, 1
      %p103 = scmp.ne.s32.totalorder %s98, %s100
      %p104 = scmp.eq.s32.totalorder %s27, 0
      %p105 = por %p103, %p104
      %p106 = scmp.ne.s32.totalorder %s98, %s100
      %p107 = scmp.eq.s32.totalorder %s32, 1
      %p108 = por %p106, %p107
      %p109 = scmp.ne.s32.totalorder %s100, %s101
      %p110 = scmp.eq.s32.totalorder %s32, 0
      %p111 = por %p109, %p110
      %p112 = scmp.ne.s32.totalorder %s100, %s101
      %p113 = scmp.eq.s32.totalorder %s33, 1
      %p114 = por %p112, %p113
      %p116 = scmp.ne.s32.totalorder %s101, %s115
      %p117 = scmp.eq.s32.totalorder %s33, 0
      %p118 = por %p116, %p117
      %s119 = ssub.s32 %s27, %s34
      %p120 = scmp.eq.s32.totalorder %s119, 0
      %s122 = sadd.s32 %s121, 1
      %s123 = scalar_select %p120, %s121, %s122
      %p126 = pneg %p120
      %p127 = scmp.eq.s32.totalorder %s27, 1
      %p128 = por %p126, %p127
      %p129 = scmp.ne.s32.totalorder %s121, %s124
      %p130 = scmp.eq.s32.totalorder %s27, 0
      %p131 = por %p129, %p130
      %p132 = scmp.ne.s32.totalorder %s121, %s124
      %p133 = scmp.eq.s32.totalorder %s32, 1
      %p134 = por %p132, %p133
      %p135 = scmp.ne.s32.totalorder %s124, %s125
      %p136 = scmp.eq.s32.totalorder %s32, 0
      %p137 = por %p135, %p136
      %p138 = scmp.ne.s32.totalorder %s124, %s125
      %p139 = scmp.eq.s32.totalorder %s33, 1
      %p140 = por %p138, %p139
      %p142 = scmp.ne.s32.totalorder %s125, %s141
      %p143 = scmp.eq.s32.totalorder %s33, 0
      %p144 = por %p142, %p143
      %s145 = ssub.s32 %s27, %s34
      %p146 = scmp.eq.s32.totalorder %s145, 0
      %s148 = sadd.s32 %s147, 1
      %s149 = scalar_select %p146, %s147, %s148
      %p152 = pneg %p146
      %p153 = scmp.eq.s32.totalorder %s27, 1
      %p154 = por %p152, %p153
      %p155 = scmp.ne.s32.totalorder %s147, %s150
      %p156 = scmp.eq.s32.totalorder %s27, 0
      %p157 = por %p155, %p156
      %p158 = scmp.ne.s32.totalorder %s147, %s150
      %p159 = scmp.eq.s32.totalorder %s32, 1
      %p160 = por %p158, %p159
      %p161 = scmp.ne.s32.totalorder %s150, %s151
      %p162 = scmp.eq.s32.totalorder %s32, 0
      %p163 = por %p161, %p162
      %p164 = scmp.ne.s32.totalorder %s150, %s151
      %p165 = scmp.eq.s32.totalorder %s33, 1
      %p166 = por %p164, %p165
      %p168 = scmp.ne.s32.totalorder %s151, %s167
      %p169 = scmp.eq.s32.totalorder %s33, 0
      %p170 = por %p168, %p169
      %s171 = ssub.s32 %s27, %s34
      %p172 = scmp.eq.s32.totalorder %s171, 0
      %s174 = sadd.s32 %s173, 1
      %s175 = scalar_select %p172, %s173, %s174
      %p178 = pneg %p172
      %p179 = scmp.eq.s32.totalorder %s27, 1
      %p180 = por %p178, %p179
      %p181 = scmp.ne.s32.totalorder %s173, %s176
      %p182 = scmp.eq.s32.totalorder %s27, 0
      %p183 = por %p181, %p182
      %p184 = scmp.ne.s32.totalorder %s173, %s176
      %p185 = scmp.eq.s32.totalorder %s32, 1
      %p186 = por %p184, %p185
      %p187 = scmp.ne.s32.totalorder %s176, %s177
      %p188 = scmp.eq.s32.totalorder %s32, 0
      %p189 = por %p187, %p188
      %p190 = scmp.ne.s32.totalorder %s176, %s177
      %p191 = scmp.eq.s32.totalorder %s33, 1
      %p192 = por %p190, %p191
      %p194 = scmp.ne.s32.totalorder %s177, %s193
      %p195 = scmp.eq.s32.totalorder %s33, 0
      %p196 = por %p194, %p195
      %s198 = sadd.s32 %s197, 1
      %p201 = scmp.eq.s32.totalorder %s27, 1
      %p202 = scmp.ne.s32.totalorder %s197, %s199
      %p203 = scmp.eq.s32.totalorder %s27, 0
      %p204 = por %p202, %p203
      %p205 = scmp.ne.s32.totalorder %s197, %s199
      %p206 = scmp.eq.s32.totalorder %s32, 1
      %p207 = por %p205, %p206
      %p208 = scmp.ne.s32.totalorder %s199, %s200
      %p209 = scmp.eq.s32.totalorder %s32, 0
      %p210 = por %p208, %p209
      %p211 = scmp.ne.s32.totalorder %s199, %s200
      %p212 = scmp.eq.s32.totalorder %s33, 1
      %p213 = por %p211, %p212
      %p215 = scmp.ne.s32.totalorder %s200, %s214
      %p216 = scmp.eq.s32.totalorder %s33, 0
      %p217 = por %p215, %p216
      %s219 = sadd.s32 %s218, 1
      %p222 = scmp.eq.s32.totalorder %s27, 1
      %p223 = scmp.ne.s32.totalorder %s218, %s220
      %p224 = scmp.eq.s32.totalorder %s27, 0
      %p225 = por %p223, %p224
      %p226 = scmp.ne.s32.totalorder %s218, %s220
      %p227 = scmp.eq.s32.totalorder %s32, 1
      %p228 = por %p226, %p227
      %p229 = scmp.ne.s32.totalorder %s220, %s221
      %p230 = scmp.eq.s32.totalorder %s32, 0
      %p231 = por %p229, %p230
      %p232 = scmp.ne.s32.totalorder %s220, %s221
      %p233 = scmp.eq.s32.totalorder %s33, 1
      %p234 = por %p232, %p233
      %p236 = scmp.ne.s32.totalorder %s221, %s235
      %p237 = scmp.eq.s32.totalorder %s33, 0
      %p238 = por %p236, %p237
      %p239 = scmp.le.s32.totalorder 1, %s27
      %p240 = scmp.lt.s32.totalorder %s27, 3
      %p241 = pnand %p239, %p240
      %p242 = pneg %p241
      // Predicated region
      $region9: #{tpu_custom_call.1} parent=5 // pred_check
        _
      $region10: #{tpu_custom_call.1} parent=5 // pred_check_branch
        %244 = sbr.rel (%p241) target = $region12
      $region11: #{tpu_custom_call.1} parent=5 // pred_region
        %s245 = ssub.s32 %s27, 1
        // Predicated region
        $region13: #{tpu_custom_call.1} parent=11 // pred_check
          %p246 = pneg %p48
        $region14: #{tpu_custom_call.1} parent=11 // pred_check_branch
          %248 = sbr.rel (%p246) target = $region16
        $region15: #{tpu_custom_call.1} parent=11 // pred_region
          %250 = vsyncadd [#allocation10], 0
          %s252 = sshll.u32 %s0, 4
          %s253 = int_to_ptr.hbm [resolvable:$true] %s252
          %255 = dma.hbm_to_smem %s253, 16, [#allocation7], [#allocation10]
        $region16: #{tpu_custom_call.1} parent=11 // pred_fallthru
          _
        // Predicated region
        $region17: #{tpu_custom_call.1} parent=11 // pred_check
          %p256 = pneg %p69
        $region18: #{tpu_custom_call.1} parent=11 // pred_check_branch
          %258 = sbr.rel (%p256) target = $region20
        $region19: #{tpu_custom_call.1} parent=11 // pred_region
          %260 = vsyncadd [#allocation8], 0
          %s261 = sshll.u32 %s3, 4
          %s262 = int_to_ptr.hbm [resolvable:$true] %s261
          %s263 = sshll.u32 [#allocation11], 4
          %s264 = int_to_ptr.vmem [resolvable:$true] %s263
          %269 = dma.hbm_to_vmem [thread:$0]  %s262, 256, %s264, [#allocation8], 128, 128, 8
        $region20: #{tpu_custom_call.1} parent=11 // pred_fallthru
          _
        // Predicated region
        $region21: #{tpu_custom_call.1} parent=11 // pred_check
          %p270 = pneg %p90
        $region22: #{tpu_custom_call.1} parent=11 // pred_check_branch
          %272 = sbr.rel (%p270) target = $region24
        $region23: #{tpu_custom_call.1} parent=11 // pred_region
          %274 = vsyncadd [#allocation13], 0
          %s275 = sshll.u32 %s4, 4
          %s276 = int_to_ptr.hbm [resolvable:$true] %s275
          %s277 = sshll.u32 [#allocation12], 4
          %s278 = int_to_ptr.vmem [resolvable:$true] %s277
          %283 = dma.hbm_to_vmem [thread:$0]  %s276, 256, %s278, [#allocation13], 128, 128, 8
        $region24: #{tpu_custom_call.1} parent=11 // pred_fallthru
          _
        // Predicated region
        $region25: #{tpu_custom_call.1} parent=11 // pred_check
          %p284 = pneg %p111
        $region26: #{tpu_custom_call.1} parent=11 // pred_check_branch
          %286 = sbr.rel (%p284) target = $region28
        $region27: #{tpu_custom_call.1} parent=11 // pred_region
          %288 = vsyncadd [#allocation13], 0
          %s289 = sshll.u32 %s5, 4
          %s290 = int_to_ptr.hbm [resolvable:$true] %s289
          %s291 = sshll.u32 [#allocation14], 4
          %s292 = int_to_ptr.vmem [resolvable:$true] %s291
          %297 = dma.hbm_to_vmem [thread:$0]  %s290, 128, %s292, [#allocation13], 64, 64, 4
        $region28: #{tpu_custom_call.1} parent=11 // pred_fallthru
          _
      $region12: #{tpu_custom_call.1} parent=5 // pred_fallthru
        _
      %p298 = scmp.lt.s32.totalorder %s27, 2
      // Predicated region
      $region29: #{tpu_custom_call.1} parent=5 // pred_check
        %p299 = pneg %p298
      $region30: #{tpu_custom_call.1} parent=5 // pred_check_branch
        %301 = sbr.rel (%p299) target = $region32
      $region31: #{tpu_custom_call.1} parent=5 // pred_region
        // Predicated region
        $region33: #{tpu_custom_call.1} parent=31 // pred_check
          %p302 = pneg %p131
        $region34: #{tpu_custom_call.1} parent=31 // pred_check_branch
          %304 = sbr.rel (%p302) target = $region36
        $region35: #{tpu_custom_call.1} parent=31 // pred_region
          %s305 = sand.u32 %s27, 1
          %s306 = scalar_lea.sflag [#allocation16], %s305
          %s307 = sand.u32 %s121, 1
          %s308 = smul.addr %s307, 256
          %s309 = scalar_lea.vmem [#allocation15], %s308
          %s310 = smul.u32 4, %s27
          %312 = vsyncadd %s306, 0
          %s313 = smul.addr %s310, 4
          %s314 = scalar_lea.hbm %s6, %s313
          %s315 = sshll.u32 %s314, 4
          %s316 = int_to_ptr.hbm [resolvable:$true] %s315
          %s317 = sshll.u32 %s309, 4
          %s318 = int_to_ptr.vmem [resolvable:$true] %s317
          %323 = dma.hbm_to_vmem [thread:$0]  %s316, 4096, %s318, %s306, 512, 256, 16
        $region36: #{tpu_custom_call.1} parent=31 // pred_fallthru
          _
        // Predicated region
        $region37: #{tpu_custom_call.1} parent=31 // pred_check
          %p324 = pneg %p157
        $region38: #{tpu_custom_call.1} parent=31 // pred_check_branch
          %326 = sbr.rel (%p324) target = $region40
        $region39: #{tpu_custom_call.1} parent=31 // pred_region
          %s327 = sand.u32 %s27, 1
          %s328 = scalar_lea.sflag [#allocation16], %s327
          %s329 = sand.u32 %s147, 1
          %s330 = smul.addr %s329, 4
          %s331 = scalar_lea.vmem [#allocation17], %s330
          %s332 = smul.u32 4, %s27
          %334 = vsyncadd %s328, 0
          %s335 = scalar_lea.hbm %s7, %s332
          %s337 = sshll.u32 %s335, 4
          %s338 = int_to_ptr.hbm [resolvable:$true] %s337
          %s339 = sshll.u32 %s331, 4
          %s340 = int_to_ptr.vmem [resolvable:$true] %s339
          %342 = dma.hbm_to_vmem [thread:$0]  %s338, 64, %s340, %s328
        $region40: #{tpu_custom_call.1} parent=31 // pred_fallthru
          _
      $region32: #{tpu_custom_call.1} parent=5 // pred_fallthru
        _
      %p343 = scmp.le.s32.totalorder 1, %s27
      %p344 = scmp.lt.s32.totalorder %s27, 3
      %p345 = pnand %p343, %p344
      %p346 = pneg %p345
      // Predicated region
      $region41: #{tpu_custom_call.1} parent=5 // pred_check
        _
      $region42: #{tpu_custom_call.1} parent=5 // pred_check_branch
        %348 = sbr.rel (%p345) target = $region44
      $region43: #{tpu_custom_call.1} parent=5 // pred_region
        %s349 = ssub.s32 %s27, 1
        // Predicated region
        $region45: #{tpu_custom_call.1} parent=43 // pred_check
          %p350 = pneg %p48
        $region46: #{tpu_custom_call.1} parent=43 // pred_check_branch
          %352 = sbr.rel (%p350) target = $region48
        $region47: #{tpu_custom_call.1} parent=43 // pred_region
          %354 = dma.done [#allocation10], 16
        $region48: #{tpu_custom_call.1} parent=43 // pred_fallthru
          _
        // Predicated region
        $region49: #{tpu_custom_call.1} parent=43 // pred_check
          %p355 = pneg %p69
        $region50: #{tpu_custom_call.1} parent=43 // pred_check_branch
          %357 = sbr.rel (%p355) target = $region52
        $region51: #{tpu_custom_call.1} parent=43 // pred_region
          %359 = dma.done [#allocation8], 256
        $region52: #{tpu_custom_call.1} parent=43 // pred_fallthru
          _
        // Predicated region
        $region53: #{tpu_custom_call.1} parent=43 // pred_check
          %p360 = pneg %p90
        $region54: #{tpu_custom_call.1} parent=43 // pred_check_branch
          %362 = sbr.rel (%p360) target = $region56
        $region55: #{tpu_custom_call.1} parent=43 // pred_region
          %364 = dma.done [#allocation13], 256
        $region56: #{tpu_custom_call.1} parent=43 // pred_fallthru
          _
        // Predicated region
        $region57: #{tpu_custom_call.1} parent=43 // pred_check
          %p365 = pneg %p111
        $region58: #{tpu_custom_call.1} parent=43 // pred_check_branch
          %367 = sbr.rel (%p365) target = $region60
        $region59: #{tpu_custom_call.1} parent=43 // pred_region
          %369 = dma.done [#allocation13], 128
        $region60: #{tpu_custom_call.1} parent=43 // pred_fallthru
          _
        %s370 = sand.u32 %s32, 1
        %s371 = scalar_lea.sflag [#allocation16], %s370
        %s372 = sand.u32 %s124, 1
        %s373 = smul.addr %s372, 256
        %s374 = scalar_lea.vmem [#allocation15], %s373
        // Predicated region
        $region61: #{tpu_custom_call.1} parent=43 // pred_check
          %p375 = pneg %p137
        $region62: #{tpu_custom_call.1} parent=43 // pred_check_branch
          %377 = sbr.rel (%p375) target = $region64
        $region63: #{tpu_custom_call.1} parent=43 // pred_region
          %379 = dma.done %s371, 4096
        $region64: #{tpu_custom_call.1} parent=43 // pred_fallthru
          _
        %s380 = sand.u32 %s32, 1
        %s381 = scalar_lea.sflag [#allocation16], %s380
        %s382 = sand.u32 %s150, 1
        %s383 = smul.addr %s382, 4
        %s384 = scalar_lea.vmem [#allocation17], %s383
        // Predicated region
        $region65: #{tpu_custom_call.1} parent=43 // pred_check
          %p385 = pneg %p163
        $region66: #{tpu_custom_call.1} parent=43 // pred_check_branch
          %387 = sbr.rel (%p385) target = $region68
        $region67: #{tpu_custom_call.1} parent=43 // pred_region
          %389 = dma.done %s381, 64
        $region68: #{tpu_custom_call.1} parent=43 // pred_fallthru
          _
        %390 = sfence
        %p391 = pneg %p48
        %p392 = pneg %p45
        %p393 = pneg %p69
        %p394 = pneg %p66
        %p395 = pneg %p90
        %p396 = pneg %p87
        %p397 = pneg %p111
        %p398 = pneg %p108
        %s399 = sand.u32 %s32, 1
        %s400 = scalar_lea.sflag [#allocation16], %s399
        %s401 = sand.u32 %s124, 1
        %s402 = smul.addr %s401, 256
        %s403 = scalar_lea.vmem [#allocation15], %s402
        %p404 = pneg %p137
        %p405 = pneg %p134
        %s406 = sand.u32 %s32, 1
        %s407 = scalar_lea.sflag [#allocation16], %s406
        %s408 = sand.u32 %s150, 1
        %s409 = smul.addr %s408, 4
        %s410 = scalar_lea.vmem [#allocation17], %s409
        %p411 = pneg %p163
        %p412 = pneg %p160
        %p413 = pneg %p189
        %p414 = pneg %p186
        %s415 = sand.u32 %s176, 1
        %s416 = scalar_lea.sflag [#allocation9], %s415
        %s417 = sand.u32 %s176, 1
        %s418 = smul.addr %s417, 32
        %s419 = scalar_lea.vmem [#allocation18], %s418
        %p420 = pneg %p210
        %p421 = pneg %p207
        %p422 = pneg %p231
        %p423 = pneg %p228
        %s424 = smul.u32 4, %s32
        %s425 = smul.u32 4, %s32
        %s426 = smul.u32 4, %s32
        %p427 = scmp.eq.s32.totalorder %s32, 0
        // Predicated region
        $region69: #{tpu_custom_call.1} parent=43 // pred_check
          %p428 = pneg %p427
        $region70: #{tpu_custom_call.1} parent=43 // pred_check_branch
          %430 = sbr.rel (%p428) target = $region72
        $region71: #{tpu_custom_call.1} parent=43 // pred_region
          %s431 = sld [smem:[#allocation7]]
          %p432 = scmp.gt.s32.totalorder %s431, 0
          %s433 = scalar_select %p432, %s431, 0
          %p434 = scmp.lt.s32.totalorder %s433, 1023
          %s435 = scalar_select %p434, %s433, 1023
          %s436 = scalar_lea.hbm %s1, %s435
          // Predicated region
          $region73: #{tpu_custom_call.1} parent=71 // pred_check
            _
          $region74: #{tpu_custom_call.1} parent=71 // pred_check_branch
            %438 = sbr.rel target = $region76
          $region75: #{tpu_custom_call.1} parent=71 // pred_region
            %439 = sst [smem:[#allocation24]] [#allocation23]
            %440 = sst [smem:[#allocation25]] [#allocation22]
          $region76: #{tpu_custom_call.1} parent=71 // pred_fallthru
            _
          %442 = shalt.err (0)
          %s444 = sshll.u32 %s436, 4
          %s445 = int_to_ptr.hbm [resolvable:$true] %s444
          %s446 = sshll.u32 [#allocation2], 4
          %s447 = int_to_ptr.vmem [resolvable:$true] %s446
          %449 = dma.hbm_to_vmem [thread:$0]  %s445, 16, %s447, [#allocation6]
          %s450 = sld [smem:[#allocation7 + $0x1]]
          %p451 = scmp.gt.s32.totalorder %s450, 0
          %s452 = scalar_select %p451, %s450, 0
          %p453 = scmp.lt.s32.totalorder %s452, 1023
          %s454 = scalar_select %p453, %s452, 1023
          %s455 = scalar_lea.hbm %s1, %s454
          %s456 = scalar_lea.vmem [#allocation2], 1
          %s457 = scalar_lea.sflag [#allocation6], 1
          // Predicated region
          $region77: #{tpu_custom_call.1} parent=71 // pred_check
            _
          $region78: #{tpu_custom_call.1} parent=71 // pred_check_branch
            %459 = sbr.rel target = $region80
          $region79: #{tpu_custom_call.1} parent=71 // pred_region
            %460 = sst [smem:[#allocation24]] [#allocation27]
            %461 = sst [smem:[#allocation25]] [#allocation26]
          $region80: #{tpu_custom_call.1} parent=71 // pred_fallthru
            _
          %463 = shalt.err (0)
          %s465 = sshll.u32 %s455, 4
          %s466 = int_to_ptr.hbm [resolvable:$true] %s465
          %s467 = sshll.u32 %s456, 4
          %s468 = int_to_ptr.vmem [resolvable:$true] %s467
          %470 = dma.hbm_to_vmem [thread:$0]  %s466, 16, %s468, %s457
          %s471 = sld [smem:[#allocation7 + $0x2]]
          %p472 = scmp.gt.s32.totalorder %s471, 0
          %s473 = scalar_select %p472, %s471, 0
          %p474 = scmp.lt.s32.totalorder %s473, 1023
          %s475 = scalar_select %p474, %s473, 1023
          %s476 = scalar_lea.hbm %s1, %s475
          %s477 = scalar_lea.vmem [#allocation2], 2
          %s478 = scalar_lea.sflag [#allocation6], 2
          // Predicated region
          $region81: #{tpu_custom_call.1} parent=71 // pred_check
            _
          $region82: #{tpu_custom_call.1} parent=71 // pred_check_branch
            %480 = sbr.rel target = $region84
          $region83: #{tpu_custom_call.1} parent=71 // pred_region
            %481 = sst [smem:[#allocation24]] [#allocation29]
            %482 = sst [smem:[#allocation25]] [#allocation28]
          $region84: #{tpu_custom_call.1} parent=71 // pred_fallthru
            _
          %484 = shalt.err (0)
          %s486 = sshll.u32 %s476, 4
          %s487 = int_to_ptr.hbm [resolvable:$true] %s486
          %s488 = sshll.u32 %s477, 4
          %s489 = int_to_ptr.vmem [resolvable:$true] %s488
          %491 = dma.hbm_to_vmem [thread:$0]  %s487, 16, %s489, %s478
          %s492 = sld [smem:[#allocation7 + $0x3]]
          %p493 = scmp.gt.s32.totalorder %s492, 0
          %s494 = scalar_select %p493, %s492, 0
          %p495 = scmp.lt.s32.totalorder %s494, 1023
          %s496 = scalar_select %p495, %s494, 1023
          %s497 = scalar_lea.hbm %s1, %s496
          %s498 = scalar_lea.vmem [#allocation2], 3
          %s499 = scalar_lea.sflag [#allocation6], 3
          // Predicated region
          $region85: #{tpu_custom_call.1} parent=71 // pred_check
            _
          $region86: #{tpu_custom_call.1} parent=71 // pred_check_branch
            %501 = sbr.rel target = $region88
          $region87: #{tpu_custom_call.1} parent=71 // pred_region
            %502 = sst [smem:[#allocation24]] [#allocation31]
            %503 = sst [smem:[#allocation25]] [#allocation30]
          $region88: #{tpu_custom_call.1} parent=71 // pred_fallthru
            _
          %505 = shalt.err (0)
          %s507 = sshll.u32 %s497, 4
          %s508 = int_to_ptr.hbm [resolvable:$true] %s507
          %s509 = sshll.u32 %s498, 4
          %s510 = int_to_ptr.vmem [resolvable:$true] %s509
          %512 = dma.hbm_to_vmem [thread:$0]  %s508, 16, %s510, %s499
          %s513 = sld [smem:[#allocation7 + $0x4]]
          %p514 = scmp.gt.s32.totalorder %s513, 0
          %s515 = scalar_select %p514, %s513, 0
          %p516 = scmp.lt.s32.totalorder %s515, 1023
          %s517 = scalar_select %p516, %s515, 1023
          %s518 = scalar_lea.hbm %s1, %s517
          %s519 = scalar_lea.vmem [#allocation2], 4
          %s520 = scalar_lea.sflag [#allocation6], 4
          // Predicated region
          $region89: #{tpu_custom_call.1} parent=71 // pred_check
            _
          $region90: #{tpu_custom_call.1} parent=71 // pred_check_branch
            %522 = sbr.rel target = $region92
          $region91: #{tpu_custom_call.1} parent=71 // pred_region
            %523 = sst [smem:[#allocation24]] [#allocation33]
            %524 = sst [smem:[#allocation25]] [#allocation32]
          $region92: #{tpu_custom_call.1} parent=71 // pred_fallthru
            _
          %526 = shalt.err (0)
          %s528 = sshll.u32 %s518, 4
          %s529 = int_to_ptr.hbm [resolvable:$true] %s528
          %s530 = sshll.u32 %s519, 4
          %s531 = int_to_ptr.vmem [resolvable:$true] %s530
          %533 = dma.hbm_to_vmem [thread:$0]  %s529, 16, %s531, %s520
          %s534 = sld [smem:[#allocation7 + $0x5]]
          %p535 = scmp.gt.s32.totalorder %s534, 0
          %s536 = scalar_select %p535, %s534, 0
          %p537 = scmp.lt.s32.totalorder %s536, 1023
          %s538 = scalar_select %p537, %s536, 1023
          %s539 = scalar_lea.hbm %s1, %s538
          %s540 = scalar_lea.vmem [#allocation2], 5
          %s541 = scalar_lea.sflag [#allocation6], 5
          // Predicated region
          $region93: #{tpu_custom_call.1} parent=71 // pred_check
            _
          $region94: #{tpu_custom_call.1} parent=71 // pred_check_branch
            %543 = sbr.rel target = $region96
          $region95: #{tpu_custom_call.1} parent=71 // pred_region
            %544 = sst [smem:[#allocation24]] [#allocation35]
            %545 = sst [smem:[#allocation25]] [#allocation34]
          $region96: #{tpu_custom_call.1} parent=71 // pred_fallthru
            _
          %547 = shalt.err (0)
          %s549 = sshll.u32 %s539, 4
          %s550 = int_to_ptr.hbm [resolvable:$true] %s549
          %s551 = sshll.u32 %s540, 4
          %s552 = int_to_ptr.vmem [resolvable:$true] %s551
          %554 = dma.hbm_to_vmem [thread:$0]  %s550, 16, %s552, %s541
          %s555 = sld [smem:[#allocation7 + $0x6]]
          %p556 = scmp.gt.s32.totalorder %s555, 0
          %s557 = scalar_select %p556, %s555, 0
          %p558 = scmp.lt.s32.totalorder %s557, 1023
          %s559 = scalar_select %p558, %s557, 1023
          %s560 = scalar_lea.hbm %s1, %s559
          %s561 = scalar_lea.vmem [#allocation2], 6
          %s562 = scalar_lea.sflag [#allocation6], 6
          // Predicated region
          $region97: #{tpu_custom_call.1} parent=71 // pred_check
            _
          $region98: #{tpu_custom_call.1} parent=71 // pred_check_branch
            %564 = sbr.rel target = $region100
          $region99: #{tpu_custom_call.1} parent=71 // pred_region
            %565 = sst [smem:[#allocation24]] [#allocation37]
            %566 = sst [smem:[#allocation25]] [#allocation36]
          $region100: #{tpu_custom_call.1} parent=71 // pred_fallthru
            _
          %568 = shalt.err (0)
          %s570 = sshll.u32 %s560, 4
          %s571 = int_to_ptr.hbm [resolvable:$true] %s570
          %s572 = sshll.u32 %s561, 4
          %s573 = int_to_ptr.vmem [resolvable:$true] %s572
          %575 = dma.hbm_to_vmem [thread:$0]  %s571, 16, %s573, %s562
          %s576 = sld [smem:[#allocation7 + $0x7]]
          %p577 = scmp.gt.s32.totalorder %s576, 0
          %s578 = scalar_select %p577, %s576, 0
          %p579 = scmp.lt.s32.totalorder %s578, 1023
          %s580 = scalar_select %p579, %s578, 1023
          %s581 = scalar_lea.hbm %s1, %s580
          %s582 = scalar_lea.vmem [#allocation2], 7
          %s583 = scalar_lea.sflag [#allocation6], 7
          // Predicated region
          $region101: #{tpu_custom_call.1} parent=71 // pred_check
            _
          $region102: #{tpu_custom_call.1} parent=71 // pred_check_branch
            %585 = sbr.rel target = $region104
          $region103: #{tpu_custom_call.1} parent=71 // pred_region
            %586 = sst [smem:[#allocation24]] [#allocation39]
            %587 = sst [smem:[#allocation25]] [#allocation38]
          $region104: #{tpu_custom_call.1} parent=71 // pred_fallthru
            _
          %589 = shalt.err (0)
          %s591 = sshll.u32 %s581, 4
          %s592 = int_to_ptr.hbm [resolvable:$true] %s591
          %s593 = sshll.u32 %s582, 4
          %s594 = int_to_ptr.vmem [resolvable:$true] %s593
          %596 = dma.hbm_to_vmem [thread:$0]  %s592, 16, %s594, %s583
          %s597 = scalar_lea.sflag [#allocation6], 8
          // Predicated region
          $region105: #{tpu_custom_call.1} parent=71 // pred_check
            _
          $region106: #{tpu_custom_call.1} parent=71 // pred_check_branch
            %599 = sbr.rel target = $region108
          $region107: #{tpu_custom_call.1} parent=71 // pred_region
            %600 = sst [smem:[#allocation24]] [#allocation41]
            %601 = sst [smem:[#allocation25]] [#allocation40]
          $region108: #{tpu_custom_call.1} parent=71 // pred_fallthru
            _
          %603 = shalt.err (0)
          %s605 = sshll.u32 %s2, 4
          %s606 = int_to_ptr.hbm [resolvable:$true] %s605
          %s607 = sshll.u32 [#allocation5], 4
          %s608 = int_to_ptr.vmem [resolvable:$true] %s607
          %610 = dma.hbm_to_vmem [thread:$0]  %s606, 16384, %s608, %s597
          %s611 = smul.u32 1, 1
          %s612 = sshll.u32 %s611, 4
          %613 = dma.done [#allocation6], %s612
          %s614 = sshll.u32 %s611, 4
          %615 = dma.done %s457, %s614
          %s616 = sshll.u32 %s611, 4
          %617 = dma.done %s478, %s616
          %s618 = sshll.u32 %s611, 4
          %619 = dma.done %s499, %s618
          %s620 = sshll.u32 %s611, 4
          %621 = dma.done %s520, %s620
          %s622 = sshll.u32 %s611, 4
          %623 = dma.done %s541, %s622
          %s624 = sshll.u32 %s611, 4
          %625 = dma.done %s562, %s624
          %s626 = sshll.u32 %s611, 4
          %627 = dma.done %s583, %s626
          %v628 = vld [vmem:[#allocation2] sm:$0xff]
          %v629 = vpack.c.bf16 %v628, %v628
          %630 = vst [vmem:[#allocation3] sm:$0xf] %v629
          %s631 = smul.u32 4, 2
          %s632 = smul.u32 %s631, 32
          %s633 = smul.u32 %s632, 4
          %s634 = sshll.u32 %s633, 4
          %635 = dma.done %s597, %s634
          %v636 = vld [vmem:[#allocation11] sm:$0xff]
          %v637 = vld [vmem:[#allocation12] sm:$0xff]
          %v638 = vpack.c.bf16 %v636, %v636
          %639 = vst [vmem:[#allocation3 + $0x4] sm:$0xf] %v638
          %v640 = vld [vmem:[#allocation3] sm:$0xff]
          %v641 = vld [vmem:[#allocation5] sm:$0xff]
          %v642 = vld [vmem:[#allocation5 + $0x8] sm:$0xff]
          %v643 = vld [vmem:[#allocation5 + $0x10] sm:$0xff]
          %v644 = vld [vmem:[#allocation5 + $0x18] sm:$0xff]
          %v645 = vld [vmem:[#allocation5 + $0x20] sm:$0xff]
          %v646 = vld [vmem:[#allocation5 + $0x28] sm:$0xff]
          %v647 = vld [vmem:[#allocation5 + $0x30] sm:$0xff]
          %v648 = vld [vmem:[#allocation5 + $0x38] sm:$0xff]
          %v649 = vld [vmem:[#allocation5 + $0x40] sm:$0xff]
          %v650 = vld [vmem:[#allocation5 + $0x48] sm:$0xff]
          %v651 = vld [vmem:[#allocation5 + $0x50] sm:$0xff]
          %v652 = vld [vmem:[#allocation5 + $0x58] sm:$0xff]
          %v653 = vld [vmem:[#allocation5 + $0x60] sm:$0xff]
          %v654 = vld [vmem:[#allocation5 + $0x68] sm:$0xff]
          %v655 = vld [vmem:[#allocation5 + $0x70] sm:$0xff]
          %v656 = vld [vmem:[#allocation5 + $0x78] sm:$0xff]
          %v657 = vld [vmem:[#allocation5 + $0x80] sm:$0xff]
          %v658 = vld [vmem:[#allocation5 + $0x88] sm:$0xff]
          %v659 = vld [vmem:[#allocation5 + $0x90] sm:$0xff]
          %v660 = vld [vmem:[#allocation5 + $0x98] sm:$0xff]
          %v661 = vld [vmem:[#allocation5 + $0xa0] sm:$0xff]
          %v662 = vld [vmem:[#allocation5 + $0xa8] sm:$0xff]
          %v663 = vld [vmem:[#allocation5 + $0xb0] sm:$0xff]
          %v664 = vld [vmem:[#allocation5 + $0xb8] sm:$0xff]
          %v665 = vld [vmem:[#allocation5 + $0xc0] sm:$0xff]
          %v666 = vld [vmem:[#allocation5 + $0xc8] sm:$0xff]
          %v667 = vld [vmem:[#allocation5 + $0xd0] sm:$0xff]
          %v668 = vld [vmem:[#allocation5 + $0xd8] sm:$0xff]
          %v669 = vld [vmem:[#allocation5 + $0xe0] sm:$0xff]
          %v670 = vld [vmem:[#allocation5 + $0xe8] sm:$0xff]
          %v671 = vld [vmem:[#allocation5 + $0xf0] sm:$0xff]
          %v672 = vld [vmem:[#allocation5 + $0xf8] sm:$0xff]
          %v673 = vld [vmem:[#allocation5 + $0x100] sm:$0xff]
          %v674 = vld [vmem:[#allocation5 + $0x108] sm:$0xff]
          %v675 = vld [vmem:[#allocation5 + $0x110] sm:$0xff]
          %v676 = vld [vmem:[#allocation5 + $0x118] sm:$0xff]
          %v677 = vld [vmem:[#allocation5 + $0x120] sm:$0xff]
          %v678 = vld [vmem:[#allocation5 + $0x128] sm:$0xff]
          %v679 = vld [vmem:[#allocation5 + $0x130] sm:$0xff]
          %v680 = vld [vmem:[#allocation5 + $0x138] sm:$0xff]
          %v681 = vld [vmem:[#allocation5 + $0x140] sm:$0xff]
          %v682 = vld [vmem:[#allocation5 + $0x148] sm:$0xff]
          %v683 = vld [vmem:[#allocation5 + $0x150] sm:$0xff]
          %v684 = vld [vmem:[#allocation5 + $0x158] sm:$0xff]
          %v685 = vld [vmem:[#allocation5 + $0x160] sm:$0xff]
          %v686 = vld [vmem:[#allocation5 + $0x168] sm:$0xff]
          %v687 = vld [vmem:[#allocation5 + $0x170] sm:$0xff]
          %v688 = vld [vmem:[#allocation5 + $0x178] sm:$0xff]
          %v689 = vld [vmem:[#allocation5 + $0x180] sm:$0xff]
          %v690 = vld [vmem:[#allocation5 + $0x188] sm:$0xff]
          %v691 = vld [vmem:[#allocation5 + $0x190] sm:$0xff]
          %v692 = vld [vmem:[#allocation5 + $0x198] sm:$0xff]
          %v693 = vld [vmem:[#allocation5 + $0x1a0] sm:$0xff]
          %v694 = vld [vmem:[#allocation5 + $0x1a8] sm:$0xff]
          %v695 = vld [vmem:[#allocation5 + $0x1b0] sm:$0xff]
          %v696 = vld [vmem:[#allocation5 + $0x1b8] sm:$0xff]
          %v697 = vld [vmem:[#allocation5 + $0x1c0] sm:$0xff]
          %v698 = vld [vmem:[#allocation5 + $0x1c8] sm:$0xff]
          %v699 = vld [vmem:[#allocation5 + $0x1d0] sm:$0xff]
          %v700 = vld [vmem:[#allocation5 + $0x1d8] sm:$0xff]
          %v701 = vld [vmem:[#allocation5 + $0x1e0] sm:$0xff]
          %v702 = vld [vmem:[#allocation5 + $0x1e8] sm:$0xff]
          %v703 = vld [vmem:[#allocation5 + $0x1f0] sm:$0xff]
          %v704 = vld [vmem:[#allocation5 + $0x1f8] sm:$0xff]
          %v705 = vld [vmem:[#allocation14] sm:$0xf]
          %v707 = vperm.slane %v705, 0
          %v708 = vperm.slane %v705, 1
          %v709 = vperm.slane %v705, 2
          %v710 = vperm.slane %v705, 3
          %v716 = vunpack.c.l.b16 %v640
          %v717 = vunpack.c.h.b16 %v640
          %v718 = vpack.c.b16 %v716, %v716
          %v719 = vpack.c.b16 %v717, %v717
          %v786 = vunpack.c.l.b16 %v641
          %v787 = vunpack.c.h.b16 %v641
          %v788 = vunpack.c.l.b16 %v642
          %v789 = vunpack.c.h.b16 %v642
          %v790 = vunpack.c.l.b16 %v643
          %v791 = vunpack.c.h.b16 %v643
          %v792 = vunpack.c.l.b16 %v644
          %v793 = vunpack.c.h.b16 %v644
          %v794 = vunpack.c.l.b16 %v645
          %v795 = vunpack.c.h.b16 %v645
          %v796 = vunpack.c.l.b16 %v646
          %v797 = vunpack.c.h.b16 %v646
          %v798 = vunpack.c.l.b16 %v647
          %v799 = vunpack.c.h.b16 %v647
          %v800 = vunpack.c.l.b16 %v648
          %v801 = vunpack.c.h.b16 %v648
          %v802 = vunpack.c.l.b16 %v649
          %v803 = vunpack.c.h.b16 %v649
          %v804 = vunpack.c.l.b16 %v650
          %v805 = vunpack.c.h.b16 %v650
          %v806 = vunpack.c.l.b16 %v651
          %v807 = vunpack.c.h.b16 %v651
          %v808 = vunpack.c.l.b16 %v652
          %v809 = vunpack.c.h.b16 %v652
          %v810 = vunpack.c.l.b16 %v653
          %v811 = vunpack.c.h.b16 %v653
          %v812 = vunpack.c.l.b16 %v654
          %v813 = vunpack.c.h.b16 %v654
          %v814 = vunpack.c.l.b16 %v655
          %v815 = vunpack.c.h.b16 %v655
          %v816 = vunpack.c.l.b16 %v656
          %v817 = vunpack.c.h.b16 %v656
          %v818 = vunpack.c.l.b16 %v657
          %v819 = vunpack.c.h.b16 %v657
          %v820 = vunpack.c.l.b16 %v658
          %v821 = vunpack.c.h.b16 %v658
          %v822 = vunpack.c.l.b16 %v659
          %v823 = vunpack.c.h.b16 %v659
          %v824 = vunpack.c.l.b16 %v660
          %v825 = vunpack.c.h.b16 %v660
          %v826 = vunpack.c.l.b16 %v661
          %v827 = vunpack.c.h.b16 %v661
          %v828 = vunpack.c.l.b16 %v662
          %v829 = vunpack.c.h.b16 %v662
          %v830 = vunpack.c.l.b16 %v663
          %v831 = vunpack.c.h.b16 %v663
          %v832 = vunpack.c.l.b16 %v664
          %v833 = vunpack.c.h.b16 %v664
          %v834 = vunpack.c.l.b16 %v665
          %v835 = vunpack.c.h.b16 %v665
          %v836 = vunpack.c.l.b16 %v666
          %v837 = vunpack.c.h.b16 %v666
          %v838 = vunpack.c.l.b16 %v667
          %v839 = vunpack.c.h.b16 %v667
          %v840 = vunpack.c.l.b16 %v668
          %v841 = vunpack.c.h.b16 %v668
          %v842 = vunpack.c.l.b16 %v669
          %v843 = vunpack.c.h.b16 %v669
          %v844 = vunpack.c.l.b16 %v670
          %v845 = vunpack.c.h.b16 %v670
          %v846 = vunpack.c.l.b16 %v671
          %v847 = vunpack.c.h.b16 %v671
          %v848 = vunpack.c.l.b16 %v672
          %v849 = vunpack.c.h.b16 %v672
          %v850 = vunpack.c.l.b16 %v673
          %v851 = vunpack.c.h.b16 %v673
          %v852 = vunpack.c.l.b16 %v674
          %v853 = vunpack.c.h.b16 %v674
          %v854 = vunpack.c.l.b16 %v675
          %v855 = vunpack.c.h.b16 %v675
          %v856 = vunpack.c.l.b16 %v676
          %v857 = vunpack.c.h.b16 %v676
          %v858 = vunpack.c.l.b16 %v677
          %v859 = vunpack.c.h.b16 %v677
          %v860 = vunpack.c.l.b16 %v678
          %v861 = vunpack.c.h.b16 %v678
          %v862 = vunpack.c.l.b16 %v679
          %v863 = vunpack.c.h.b16 %v679
          %v864 = vunpack.c.l.b16 %v680
          %v865 = vunpack.c.h.b16 %v680
          %v866 = vunpack.c.l.b16 %v681
          %v867 = vunpack.c.h.b16 %v681
          %v868 = vunpack.c.l.b16 %v682
          %v869 = vunpack.c.h.b16 %v682
          %v870 = vunpack.c.l.b16 %v683
          %v871 = vunpack.c.h.b16 %v683
          %v872 = vunpack.c.l.b16 %v684
          %v873 = vunpack.c.h.b16 %v684
          %v874 = vunpack.c.l.b16 %v685
          %v875 = vunpack.c.h.b16 %v685
          %v876 = vunpack.c.l.b16 %v686
          %v877 = vunpack.c.h.b16 %v686
          %v878 = vunpack.c.l.b16 %v687
          %v879 = vunpack.c.h.b16 %v687
          %v880 = vunpack.c.l.b16 %v688
          %v881 = vunpack.c.h.b16 %v688
          %v882 = vunpack.c.l.b16 %v689
          %v883 = vunpack.c.h.b16 %v689
          %v884 = vunpack.c.l.b16 %v690
          %v885 = vunpack.c.h.b16 %v690
          %v886 = vunpack.c.l.b16 %v691
          %v887 = vunpack.c.h.b16 %v691
          %v888 = vunpack.c.l.b16 %v692
          %v889 = vunpack.c.h.b16 %v692
          %v890 = vunpack.c.l.b16 %v693
          %v891 = vunpack.c.h.b16 %v693
          %v892 = vunpack.c.l.b16 %v694
          %v893 = vunpack.c.h.b16 %v694
          %v894 = vunpack.c.l.b16 %v695
          %v895 = vunpack.c.h.b16 %v695
          %v896 = vunpack.c.l.b16 %v696
          %v897 = vunpack.c.h.b16 %v696
          %v898 = vunpack.c.l.b16 %v697
          %v899 = vunpack.c.h.b16 %v697
          %v900 = vunpack.c.l.b16 %v698
          %v901 = vunpack.c.h.b16 %v698
          %v902 = vunpack.c.l.b16 %v699
          %v903 = vunpack.c.h.b16 %v699
          %v904 = vunpack.c.l.b16 %v700
          %v905 = vunpack.c.h.b16 %v700
          %v906 = vunpack.c.l.b16 %v701
          %v907 = vunpack.c.h.b16 %v701
          %v908 = vunpack.c.l.b16 %v702
          %v909 = vunpack.c.h.b16 %v702
          %v910 = vunpack.c.l.b16 %v703
          %v911 = vunpack.c.h.b16 %v703
          %v912 = vunpack.c.l.b16 %v704
          %v913 = vunpack.c.h.b16 %v704
          %v914 = vpack.c.b16 %v790, %v786
          %v915 = vpack.c.b16 %v791, %v787
          %v916 = vpack.c.b16 %v792, %v788
          %v917 = vpack.c.b16 %v793, %v789
          %v918 = vpack.c.b16 %v798, %v794
          %v919 = vpack.c.b16 %v799, %v795
          %v920 = vpack.c.b16 %v800, %v796
          %v921 = vpack.c.b16 %v801, %v797
          %v922 = vpack.c.b16 %v806, %v802
          %v923 = vpack.c.b16 %v807, %v803
          %v924 = vpack.c.b16 %v808, %v804
          %v925 = vpack.c.b16 %v809, %v805
          %v926 = vpack.c.b16 %v814, %v810
          %v927 = vpack.c.b16 %v815, %v811
          %v928 = vpack.c.b16 %v816, %v812
          %v929 = vpack.c.b16 %v817, %v813
          %v930 = vpack.c.b16 %v822, %v818
          %v931 = vpack.c.b16 %v823, %v819
          %v932 = vpack.c.b16 %v824, %v820
          %v933 = vpack.c.b16 %v825, %v821
          %v934 = vpack.c.b16 %v830, %v826
          %v935 = vpack.c.b16 %v831, %v827
          %v936 = vpack.c.b16 %v832, %v828
          %v937 = vpack.c.b16 %v833, %v829
          %v938 = vpack.c.b16 %v838, %v834
          %v939 = vpack.c.b16 %v839, %v835
          %v940 = vpack.c.b16 %v840, %v836
          %v941 = vpack.c.b16 %v841, %v837
          %v942 = vpack.c.b16 %v846, %v842
          %v943 = vpack.c.b16 %v847, %v843
          %v944 = vpack.c.b16 %v848, %v844
          %v945 = vpack.c.b16 %v849, %v845
          %v946 = vpack.c.b16 %v854, %v850
          %v947 = vpack.c.b16 %v855, %v851
          %v948 = vpack.c.b16 %v856, %v852
          %v949 = vpack.c.b16 %v857, %v853
          %v950 = vpack.c.b16 %v862, %v858
          %v951 = vpack.c.b16 %v863, %v859
          %v952 = vpack.c.b16 %v864, %v860
          %v953 = vpack.c.b16 %v865, %v861
          %v954 = vpack.c.b16 %v870, %v866
          %v955 = vpack.c.b16 %v871, %v867
          %v956 = vpack.c.b16 %v872, %v868
          %v957 = vpack.c.b16 %v873, %v869
          %v958 = vpack.c.b16 %v878, %v874
          %v959 = vpack.c.b16 %v879, %v875
          %v960 = vpack.c.b16 %v880, %v876
          %v961 = vpack.c.b16 %v881, %v877
          %v962 = vpack.c.b16 %v886, %v882
          %v963 = vpack.c.b16 %v887, %v883
          %v964 = vpack.c.b16 %v888, %v884
          %v965 = vpack.c.b16 %v889, %v885
          %v966 = vpack.c.b16 %v894, %v890
          %v967 = vpack.c.b16 %v895, %v891
          %v968 = vpack.c.b16 %v896, %v892
          %v969 = vpack.c.b16 %v897, %v893
          %v970 = vpack.c.b16 %v902, %v898
          %v971 = vpack.c.b16 %v903, %v899
          %v972 = vpack.c.b16 %v904, %v900
          %v973 = vpack.c.b16 %v905, %v901
          %v974 = vpack.c.b16 %v910, %v906
          %v975 = vpack.c.b16 %v911, %v907
          %v976 = vpack.c.b16 %v912, %v908
          %v977 = vpack.c.b16 %v913, %v909
          %1042 = vmatpush.bf16.msra.mxu0 %v942
          %1043 = vmatpush.bf16.msra.mxu0 %v938
          %1044 = vmatpush.bf16.msra.mxu0 %v934
          %1045 = vmatpush.bf16.msra.mxu0 %v930
          %1046 = vmatpush.bf16.msra.mxu0 %v926
          %1047 = vmatpush.bf16.msra.mxu0 %v922
          %1048 = vmatpush.bf16.msra.mxu0 %v918
          %1049 = vmatpush.bf16.msra.mxu0 %v914
          %1050 = vmatmul.bf16.gmra.mxu0 %v718
          %v1051 = vpop.f32.mrf.mxu0
          %v1052 = vadd.f32 %v707, %v1051
          %v1053 = vpop.f32.mrf.mxu0
          %1054 = vdwg.mxu0
          %1055 = vmatpush.bf16.msra.mxu0 %v974
          %1056 = vmatpush.bf16.msra.mxu0 %v970
          %1057 = vmatpush.bf16.msra.mxu0 %v966
          %1058 = vmatpush.bf16.msra.mxu0 %v962
          %1059 = vmatpush.bf16.msra.mxu0 %v958
          %1060 = vmatpush.bf16.msra.mxu0 %v954
          %1061 = vmatpush.bf16.msra.mxu0 %v950
          %1062 = vmatpush.bf16.msra.mxu0 %v946
          %1063 = vmatmul.bf16.gmra.mxu0 %v719
          %v1064 = vpop.f32.mrf.mxu0
          %v1065 = vadd.f32 %v1052, %v1064
          %v1066 = vpop.f32.mrf.mxu0
          %1067 = vdwg.mxu0
          %1068 = vmatpush.bf16.msra.mxu0 %v943
          %1069 = vmatpush.bf16.msra.mxu0 %v939
          %1070 = vmatpush.bf16.msra.mxu0 %v935
          %1071 = vmatpush.bf16.msra.mxu0 %v931
          %1072 = vmatpush.bf16.msra.mxu0 %v927
          %1073 = vmatpush.bf16.msra.mxu0 %v923
          %1074 = vmatpush.bf16.msra.mxu0 %v919
          %1075 = vmatpush.bf16.msra.mxu0 %v915
          %1076 = vmatmul.bf16.gmra.mxu0 %v718
          %v1077 = vpop.f32.mrf.mxu0
          %v1078 = vadd.f32 %v708, %v1077
          %v1079 = vpop.f32.mrf.mxu0
          %1080 = vdwg.mxu0
          %1081 = vmatpush.bf16.msra.mxu0 %v975
          %1082 = vmatpush.bf16.msra.mxu0 %v971
          %1083 = vmatpush.bf16.msra.mxu0 %v967
          %1084 = vmatpush.bf16.msra.mxu0 %v963
          %1085 = vmatpush.bf16.msra.mxu0 %v959
          %1086 = vmatpush.bf16.msra.mxu0 %v955
          %1087 = vmatpush.bf16.msra.mxu0 %v951
          %1088 = vmatpush.bf16.msra.mxu0 %v947
          %1089 = vmatmul.bf16.gmra.mxu0 %v719
          %v1090 = vpop.f32.mrf.mxu0
          %v1091 = vadd.f32 %v1078, %v1090
          %v1092 = vpop.f32.mrf.mxu0
          %1093 = vdwg.mxu0
          %1094 = vmatpush.bf16.msra.mxu0 %v944
          %1095 = vmatpush.bf16.msra.mxu0 %v940
          %1096 = vmatpush.bf16.msra.mxu0 %v936
          %1097 = vmatpush.bf16.msra.mxu0 %v932
          %1098 = vmatpush.bf16.msra.mxu0 %v928
          %1099 = vmatpush.bf16.msra.mxu0 %v924
          %1100 = vmatpush.bf16.msra.mxu0 %v920
          %1101 = vmatpush.bf16.msra.mxu0 %v916
          %1102 = vmatmul.bf16.gmra.mxu0 %v718
          %v1103 = vpop.f32.mrf.mxu0
          %v1104 = vadd.f32 %v709, %v1103
          %v1105 = vpop.f32.mrf.mxu0
          %1106 = vdwg.mxu0
          %1107 = vmatpush.bf16.msra.mxu0 %v976
          %1108 = vmatpush.bf16.msra.mxu0 %v972
          %1109 = vmatpush.bf16.msra.mxu0 %v968
          %1110 = vmatpush.bf16.msra.mxu0 %v964
          %1111 = vmatpush.bf16.msra.mxu0 %v960
          %1112 = vmatpush.bf16.msra.mxu0 %v956
          %1113 = vmatpush.bf16.msra.mxu0 %v952
          %1114 = vmatpush.bf16.msra.mxu0 %v948
          %1115 = vmatmul.bf16.gmra.mxu0 %v719
          %v1116 = vpop.f32.mrf.mxu0
          %v1117 = vadd.f32 %v1104, %v1116
          %v1118 = vpop.f32.mrf.mxu0
          %1119 = vdwg.mxu0
          %1120 = vmatpush.bf16.msra.mxu0 %v945
          %1121 = vmatpush.bf16.msra.mxu0 %v941
          %1122 = vmatpush.bf16.msra.mxu0 %v937
          %1123 = vmatpush.bf16.msra.mxu0 %v933
          %1124 = vmatpush.bf16.msra.mxu0 %v929
          %1125 = vmatpush.bf16.msra.mxu0 %v925
          %1126 = vmatpush.bf16.msra.mxu0 %v921
          %1127 = vmatpush.bf16.msra.mxu0 %v917
          %1128 = vmatmul.bf16.gmra.mxu0 %v718
          %v1129 = vpop.f32.mrf.mxu0
          %v1130 = vadd.f32 %v710, %v1129
          %v1131 = vpop.f32.mrf.mxu0
          %1132 = vdwg.mxu0
          %1133 = vmatpush.bf16.msra.mxu0 %v977
          %1134 = vmatpush.bf16.msra.mxu0 %v973
          %1135 = vmatpush.bf16.msra.mxu0 %v969
          %1136 = vmatpush.bf16.msra.mxu0 %v965
          %1137 = vmatpush.bf16.msra.mxu0 %v961
          %1138 = vmatpush.bf16.msra.mxu0 %v957
          %1139 = vmatpush.bf16.msra.mxu0 %v953
          %1140 = vmatpush.bf16.msra.mxu0 %v949
          %1141 = vmatmul.bf16.gmra.mxu0 %v719
          %v1142 = vpop.f32.mrf.mxu0
          %v1143 = vadd.f32 %v1130, %v1142
          %v1144 = vpop.f32.mrf.mxu0
          %1145 = vdwg.mxu0
          %v1146 = vxor.u32 %v1065, 2147483648
          %v1147 = vxor.u32 %v1091, 2147483648
          %v1148 = vxor.u32 %v1117, 2147483648
          %v1149 = vmul.f32 %v1146, 1.442695
          %v1150 = vpow.pop %v1149
          %v1151 = vmul.f32 %v1147, 1.442695
          %v1152 = vpow.pop %v1151
          %v1153 = vmul.f32 %v1148, 1.442695
          %v1154 = vpow.pop %v1153
          %v1155 = vadd.f32 %v1150, 1.0
          %v1156 = vadd.f32 %v1152, 1.0
          %v1157 = vadd.f32 %v1154, 1.0
          %v1158 = vrcp.pop %v1155
          %v1159 = vmul.f32 %v1155, %v1158
          %v1160 = vsub.f32 1.0, %v1159
          %v1161 = vmul.f32 %v1158, %v1160
          %v1162 = vadd.f32 %v1158, %v1161
          %vm1163 = vweird.f32 %v1155
          %vm1164 = vweird.f32 %v1158
          %vm1165 = vmor %vm1163, %vm1164
          %v1166 = vsel %vm1165, %v1158, %v1162
          %v1167 = vand.u32 2147483647, %v1155
          %vm1168 = vcmp.eq.f32.partialorder %v1167, 8.507059e+37
          %v1169 = vand.u32 %v1155, 2147483648
          %v1170 = vor.u32 1.1754944e-38, %v1169
          %v1171 = vsel %vm1168, %v1170, %v1166
          %v1172 = vmul.f32 1.0, %v1171
          %v1173 = vrcp.pop %v1156
          %v1174 = vmul.f32 %v1156, %v1173
          %v1175 = vsub.f32 1.0, %v1174
          %v1176 = vmul.f32 %v1173, %v1175
          %v1177 = vadd.f32 %v1173, %v1176
          %vm1178 = vweird.f32 %v1156
          %vm1179 = vweird.f32 %v1173
          %vm1180 = vmor %vm1178, %vm1179
          %v1181 = vsel %vm1180, %v1173, %v1177
          %v1182 = vand.u32 2147483647, %v1156
          %vm1183 = vcmp.eq.f32.partialorder %v1182, 8.507059e+37
          %v1184 = vand.u32 %v1156, 2147483648
          %v1185 = vor.u32 1.1754944e-38, %v1184
          %v1186 = vsel %vm1183, %v1185, %v1181
          %v1187 = vmul.f32 1.0, %v1186
          %v1188 = vrcp.pop %v1157
          %v1189 = vmul.f32 %v1157, %v1188
          %v1190 = vsub.f32 1.0, %v1189
          %v1191 = vmul.f32 %v1188, %v1190
          %v1192 = vadd.f32 %v1188, %v1191
          %vm1193 = vweird.f32 %v1157
          %vm1194 = vweird.f32 %v1188
          %vm1195 = vmor %vm1193, %vm1194
          %v1196 = vsel %vm1195, %v1188, %v1192
          %v1197 = vand.u32 2147483647, %v1157
          %vm1198 = vcmp.eq.f32.partialorder %v1197, 8.507059e+37
          %v1199 = vand.u32 %v1157, 2147483648
          %v1200 = vor.u32 1.1754944e-38, %v1199
          %v1201 = vsel %vm1198, %v1200, %v1196
          %v1202 = vmul.f32 1.0, %v1201
          %v1203 = vtanh.pop %v1143
          %v1204 = vmul.f32 %v1187, %v637
          %v1205 = vmul.f32 %v1172, %v1203
          %v1206 = vadd.f32 %v1204, %v1205
          %v1207 = vtanh.pop %v1206
          %v1208 = vmul.f32 %v1202, %v1207
          %1209 = vst [vmem:[#allocation19] sm:$0xff] %v1208
          %1210 = vst [vmem:[#allocation21] sm:$0xff] %v1206
          %v1211 = vpack.c.bf16 %v1208, %v1208
          %1212 = vst [vmem:[#allocation3] sm:$0xf] %v1211
          %s1213 = scalar_lea.vmem [#allocation11], 8
          %v1214 = vld [vmem:[%s1213] sm:$0xff]
          %s1215 = scalar_lea.vmem [#allocation12], 8
          %v1216 = vld [vmem:[%s1215] sm:$0xff]
          %v1217 = vpack.c.bf16 %v1214, %v1214
          %1218 = vst [vmem:[#allocation3 + $0x4] sm:$0xf] %v1217
          %v1219 = vld [vmem:[#allocation3] sm:$0xff]
          %s1220 = scalar_lea.vmem [#allocation5], 512
          %v1221 = vld [vmem:[%s1220] sm:$0xff]
          %v1222 = vld [vmem:[%s1220 + $0x8] sm:$0xff]
          %v1223 = vld [vmem:[%s1220 + $0x10] sm:$0xff]
          %v1224 = vld [vmem:[%s1220 + $0x18] sm:$0xff]
          %v1225 = vld [vmem:[%s1220 + $0x20] sm:$0xff]
          %v1226 = vld [vmem:[%s1220 + $0x28] sm:$0xff]
          %v1227 = vld [vmem:[%s1220 + $0x30] sm:$0xff]
          %v1228 = vld [vmem:[%s1220 + $0x38] sm:$0xff]
          %v1229 = vld [vmem:[%s1220 + $0x40] sm:$0xff]
          %v1230 = vld [vmem:[%s1220 + $0x48] sm:$0xff]
          %v1231 = vld [vmem:[%s1220 + $0x50] sm:$0xff]
          %v1232 = vld [vmem:[%s1220 + $0x58] sm:$0xff]
          %v1233 = vld [vmem:[%s1220 + $0x60] sm:$0xff]
          %v1234 = vld [vmem:[%s1220 + $0x68] sm:$0xff]
          %v1235 = vld [vmem:[%s1220 + $0x70] sm:$0xff]
          %v1236 = vld [vmem:[%s1220 + $0x78] sm:$0xff]
          %v1237 = vld [vmem:[%s1220 + $0x80] sm:$0xff]
          %v1238 = vld [vmem:[%s1220 + $0x88] sm:$0xff]
          %v1239 = vld [vmem:[%s1220 + $0x90] sm:$0xff]
          %v1240 = vld [vmem:[%s1220 + $0x98] sm:$0xff]
          %v1241 = vld [vmem:[%s1220 + $0xa0] sm:$0xff]
          %v1242 = vld [vmem:[%s1220 + $0xa8] sm:$0xff]
          %v1243 = vld [vmem:[%s1220 + $0xb0] sm:$0xff]
          %v1244 = vld [vmem:[%s1220 + $0xb8] sm:$0xff]
          %v1245 = vld [vmem:[%s1220 + $0xc0] sm:$0xff]
          %v1246 = vld [vmem:[%s1220 + $0xc8] sm:$0xff]
          %v1247 = vld [vmem:[%s1220 + $0xd0] sm:$0xff]
          %v1248 = vld [vmem:[%s1220 + $0xd8] sm:$0xff]
          %v1249 = vld [vmem:[%s1220 + $0xe0] sm:$0xff]
          %v1250 = vld [vmem:[%s1220 + $0xe8] sm:$0xff]
          %v1251 = vld [vmem:[%s1220 + $0xf0] sm:$0xff]
          %v1252 = vld [vmem:[%s1220 + $0xf8] sm:$0xff]
          %v1253 = vld [vmem:[%s1220 + $0x100] sm:$0xff]
          %v1254 = vld [vmem:[%s1220 + $0x108] sm:$0xff]
          %v1255 = vld [vmem:[%s1220 + $0x110] sm:$0xff]
          %v1256 = vld [vmem:[%s1220 + $0x118] sm:$0xff]
          %v1257 = vld [vmem:[%s1220 + $0x120] sm:$0xff]
          %v1258 = vld [vmem:[%s1220 + $0x128] sm:$0xff]
          %v1259 = vld [vmem:[%s1220 + $0x130] sm:$0xff]
          %v1260 = vld [vmem:[%s1220 + $0x138] sm:$0xff]
          %v1261 = vld [vmem:[%s1220 + $0x140] sm:$0xff]
          %v1262 = vld [vmem:[%s1220 + $0x148] sm:$0xff]
          %v1263 = vld [vmem:[%s1220 + $0x150] sm:$0xff]
          %v1264 = vld [vmem:[%s1220 + $0x158] sm:$0xff]
          %v1265 = vld [vmem:[%s1220 + $0x160] sm:$0xff]
          %v1266 = vld [vmem:[%s1220 + $0x168] sm:$0xff]
          %v1267 = vld [vmem:[%s1220 + $0x170] sm:$0xff]
          %v1268 = vld [vmem:[%s1220 + $0x178] sm:$0xff]
          %v1269 = vld [vmem:[%s1220 + $0x180] sm:$0xff]
          %v1270 = vld [vmem:[%s1220 + $0x188] sm:$0xff]
          %v1271 = vld [vmem:[%s1220 + $0x190] sm:$0xff]
          %v1272 = vld [vmem:[%s1220 + $0x198] sm:$0xff]
          %v1273 = vld [vmem:[%s1220 + $0x1a0] sm:$0xff]
          %v1274 = vld [vmem:[%s1220 + $0x1a8] sm:$0xff]
          %v1275 = vld [vmem:[%s1220 + $0x1b0] sm:$0xff]
          %v1276 = vld [vmem:[%s1220 + $0x1b8] sm:$0xff]
          %v1277 = vld [vmem:[%s1220 + $0x1c0] sm:$0xff]
          %v1278 = vld [vmem:[%s1220 + $0x1c8] sm:$0xff]
          %v1279 = vld [vmem:[%s1220 + $0x1d0] sm:$0xff]
          %v1280 = vld [vmem:[%s1220 + $0x1d8] sm:$0xff]
          %v1281 = vld [vmem:[%s1220 + $0x1e0] sm:$0xff]
          %v1282 = vld [vmem:[%s1220 + $0x1e8] sm:$0xff]
          %v1283 = vld [vmem:[%s1220 + $0x1f0] sm:$0xff]
          %v1284 = vld [vmem:[%s1220 + $0x1f8] sm:$0xff]
          %s1285 = scalar_lea.vmem [#allocation14], 4
          %v1286 = vld [vmem:[%s1285] sm:$0xf]
          %v1288 = vperm.slane %v1286, 0
          %v1289 = vperm.slane %v1286, 1
          %v1290 = vperm.slane %v1286, 2
          %v1291 = vperm.slane %v1286, 3
          %v1297 = vunpack.c.l.b16 %v1219
          %v1298 = vunpack.c.h.b16 %v1219
          %v1299 = vpack.c.b16 %v1297, %v1297
          %v1300 = vpack.c.b16 %v1298, %v1298
          %v1367 = vunpack.c.l.b16 %v1221
          %v1368 = vunpack.c.h.b16 %v1221
          %v1369 = vunpack.c.l.b16 %v1222
          %v1370 = vunpack.c.h.b16 %v1222
          %v1371 = vunpack.c.l.b16 %v1223
          %v1372 = vunpack.c.h.b16 %v1223
          %v1373 = vunpack.c.l.b16 %v1224
          %v1374 = vunpack.c.h.b16 %v1224
          %v1375 = vunpack.c.l.b16 %v1225
          %v1376 = vunpack.c.h.b16 %v1225
          %v1377 = vunpack.c.l.b16 %v1226
          %v1378 = vunpack.c.h.b16 %v1226
          %v1379 = vunpack.c.l.b16 %v1227
          %v1380 = vunpack.c.h.b16 %v1227
          %v1381 = vunpack.c.l.b16 %v1228
          %v1382 = vunpack.c.h.b16 %v1228
          %v1383 = vunpack.c.l.b16 %v1229
          %v1384 = vunpack.c.h.b16 %v1229
          %v1385 = vunpack.c.l.b16 %v1230
          %v1386 = vunpack.c.h.b16 %v1230
          %v1387 = vunpack.c.l.b16 %v1231
          %v1388 = vunpack.c.h.b16 %v1231
          %v1389 = vunpack.c.l.b16 %v1232
          %v1390 = vunpack.c.h.b16 %v1232
          %v1391 = vunpack.c.l.b16 %v1233
          %v1392 = vunpack.c.h.b16 %v1233
          %v1393 = vunpack.c.l.b16 %v1234
          %v1394 = vunpack.c.h.b16 %v1234
          %v1395 = vunpack.c.l.b16 %v1235
          %v1396 = vunpack.c.h.b16 %v1235
          %v1397 = vunpack.c.l.b16 %v1236
          %v1398 = vunpack.c.h.b16 %v1236
          %v1399 = vunpack.c.l.b16 %v1237
          %v1400 = vunpack.c.h.b16 %v1237
          %v1401 = vunpack.c.l.b16 %v1238
          %v1402 = vunpack.c.h.b16 %v1238
          %v1403 = vunpack.c.l.b16 %v1239
          %v1404 = vunpack.c.h.b16 %v1239
          %v1405 = vunpack.c.l.b16 %v1240
          %v1406 = vunpack.c.h.b16 %v1240
          %v1407 = vunpack.c.l.b16 %v1241
          %v1408 = vunpack.c.h.b16 %v1241
          %v1409 = vunpack.c.l.b16 %v1242
          %v1410 = vunpack.c.h.b16 %v1242
          %v1411 = vunpack.c.l.b16 %v1243
          %v1412 = vunpack.c.h.b16 %v1243
          %v1413 = vunpack.c.l.b16 %v1244
          %v1414 = vunpack.c.h.b16 %v1244
          %v1415 = vunpack.c.l.b16 %v1245
          %v1416 = vunpack.c.h.b16 %v1245
          %v1417 = vunpack.c.l.b16 %v1246
          %v1418 = vunpack.c.h.b16 %v1246
          %v1419 = vunpack.c.l.b16 %v1247
          %v1420 = vunpack.c.h.b16 %v1247
          %v1421 = vunpack.c.l.b16 %v1248
          %v1422 = vunpack.c.h.b16 %v1248
          %v1423 = vunpack.c.l.b16 %v1249
          %v1424 = vunpack.c.h.b16 %v1249
          %v1425 = vunpack.c.l.b16 %v1250
          %v1426 = vunpack.c.h.b16 %v1250
          %v1427 = vunpack.c.l.b16 %v1251
          %v1428 = vunpack.c.h.b16 %v1251
          %v1429 = vunpack.c.l.b16 %v1252
          %v1430 = vunpack.c.h.b16 %v1252
          %v1431 = vunpack.c.l.b16 %v1253
          %v1432 = vunpack.c.h.b16 %v1253
          %v1433 = vunpack.c.l.b16 %v1254
          %v1434 = vunpack.c.h.b16 %v1254
          %v1435 = vunpack.c.l.b16 %v1255
          %v1436 = vunpack.c.h.b16 %v1255
          %v1437 = vunpack.c.l.b16 %v1256
          %v1438 = vunpack.c.h.b16 %v1256
          %v1439 = vunpack.c.l.b16 %v1257
          %v1440 = vunpack.c.h.b16 %v1257
          %v1441 = vunpack.c.l.b16 %v1258
          %v1442 = vunpack.c.h.b16 %v1258
          %v1443 = vunpack.c.l.b16 %v1259
          %v1444 = vunpack.c.h.b16 %v1259
          %v1445 = vunpack.c.l.b16 %v1260
          %v1446 = vunpack.c.h.b16 %v1260
          %v1447 = vunpack.c.l.b16 %v1261
          %v1448 = vunpack.c.h.b16 %v1261
          %v1449 = vunpack.c.l.b16 %v1262
          %v1450 = vunpack.c.h.b16 %v1262
          %v1451 = vunpack.c.l.b16 %v1263
          %v1452 = vunpack.c.h.b16 %v1263
          %v1453 = vunpack.c.l.b16 %v1264
          %v1454 = vunpack.c.h.b16 %v1264
          %v1455 = vunpack.c.l.b16 %v1265
          %v1456 = vunpack.c.h.b16 %v1265
          %v1457 = vunpack.c.l.b16 %v1266
          %v1458 = vunpack.c.h.b16 %v1266
          %v1459 = vunpack.c.l.b16 %v1267
          %v1460 = vunpack.c.h.b16 %v1267
          %v1461 = vunpack.c.l.b16 %v1268
          %v1462 = vunpack.c.h.b16 %v1268
          %v1463 = vunpack.c.l.b16 %v1269
          %v1464 = vunpack.c.h.b16 %v1269
          %v1465 = vunpack.c.l.b16 %v1270
          %v1466 = vunpack.c.h.b16 %v1270
          %v1467 = vunpack.c.l.b16 %v1271
          %v1468 = vunpack.c.h.b16 %v1271
          %v1469 = vunpack.c.l.b16 %v1272
          %v1470 = vunpack.c.h.b16 %v1272
          %v1471 = vunpack.c.l.b16 %v1273
          %v1472 = vunpack.c.h.b16 %v1273
          %v1473 = vunpack.c.l.b16 %v1274
          %v1474 = vunpack.c.h.b16 %v1274
          %v1475 = vunpack.c.l.b16 %v1275
          %v1476 = vunpack.c.h.b16 %v1275
          %v1477 = vunpack.c.l.b16 %v1276
          %v1478 = vunpack.c.h.b16 %v1276
          %v1479 = vunpack.c.l.b16 %v1277
          %v1480 = vunpack.c.h.b16 %v1277
          %v1481 = vunpack.c.l.b16 %v1278
          %v1482 = vunpack.c.h.b16 %v1278
          %v1483 = vunpack.c.l.b16 %v1279
          %v1484 = vunpack.c.h.b16 %v1279
          %v1485 = vunpack.c.l.b16 %v1280
          %v1486 = vunpack.c.h.b16 %v1280
          %v1487 = vunpack.c.l.b16 %v1281
          %v1488 = vunpack.c.h.b16 %v1281
          %v1489 = vunpack.c.l.b16 %v1282
          %v1490 = vunpack.c.h.b16 %v1282
          %v1491 = vunpack.c.l.b16 %v1283
          %v1492 = vunpack.c.h.b16 %v1283
          %v1493 = vunpack.c.l.b16 %v1284
          %v1494 = vunpack.c.h.b16 %v1284
          %v1495 = vpack.c.b16 %v1371, %v1367
          %v1496 = vpack.c.b16 %v1372, %v1368
          %v1497 = vpack.c.b16 %v1373, %v1369
          %v1498 = vpack.c.b16 %v1374, %v1370
          %v1499 = vpack.c.b16 %v1379, %v1375
          %v1500 = vpack.c.b16 %v1380, %v1376
          %v1501 = vpack.c.b16 %v1381, %v1377
          %v1502 = vpack.c.b16 %v1382, %v1378
          %v1503 = vpack.c.b16 %v1387, %v1383
          %v1504 = vpack.c.b16 %v1388, %v1384
          %v1505 = vpack.c.b16 %v1389, %v1385
          %v1506 = vpack.c.b16 %v1390, %v1386
          %v1507 = vpack.c.b16 %v1395, %v1391
          %v1508 = vpack.c.b16 %v1396, %v1392
          %v1509 = vpack.c.b16 %v1397, %v1393
          %v1510 = vpack.c.b16 %v1398, %v1394
          %v1511 = vpack.c.b16 %v1403, %v1399
          %v1512 = vpack.c.b16 %v1404, %v1400
          %v1513 = vpack.c.b16 %v1405, %v1401
          %v1514 = vpack.c.b16 %v1406, %v1402
          %v1515 = vpack.c.b16 %v1411, %v1407
          %v1516 = vpack.c.b16 %v1412, %v1408
          %v1517 = vpack.c.b16 %v1413, %v1409
          %v1518 = vpack.c.b16 %v1414, %v1410
          %v1519 = vpack.c.b16 %v1419, %v1415
          %v1520 = vpack.c.b16 %v1420, %v1416
          %v1521 = vpack.c.b16 %v1421, %v1417
          %v1522 = vpack.c.b16 %v1422, %v1418
          %v1523 = vpack.c.b16 %v1427, %v1423
          %v1524 = vpack.c.b16 %v1428, %v1424
          %v1525 = vpack.c.b16 %v1429, %v1425
          %v1526 = vpack.c.b16 %v1430, %v1426
          %v1527 = vpack.c.b16 %v1435, %v1431
          %v1528 = vpack.c.b16 %v1436, %v1432
          %v1529 = vpack.c.b16 %v1437, %v1433
          %v1530 = vpack.c.b16 %v1438, %v1434
          %v1531 = vpack.c.b16 %v1443, %v1439
          %v1532 = vpack.c.b16 %v1444, %v1440
          %v1533 = vpack.c.b16 %v1445, %v1441
          %v1534 = vpack.c.b16 %v1446, %v1442
          %v1535 = vpack.c.b16 %v1451, %v1447
          %v1536 = vpack.c.b16 %v1452, %v1448
          %v1537 = vpack.c.b16 %v1453, %v1449
          %v1538 = vpack.c.b16 %v1454, %v1450
          %v1539 = vpack.c.b16 %v1459, %v1455
          %v1540 = vpack.c.b16 %v1460, %v1456
          %v1541 = vpack.c.b16 %v1461, %v1457
          %v1542 = vpack.c.b16 %v1462, %v1458
          %v1543 = vpack.c.b16 %v1467, %v1463
          %v1544 = vpack.c.b16 %v1468, %v1464
          %v1545 = vpack.c.b16 %v1469, %v1465
          %v1546 = vpack.c.b16 %v1470, %v1466
          %v1547 = vpack.c.b16 %v1475, %v1471
          %v1548 = vpack.c.b16 %v1476, %v1472
          %v1549 = vpack.c.b16 %v1477, %v1473
          %v1550 = vpack.c.b16 %v1478, %v1474
          %v1551 = vpack.c.b16 %v1483, %v1479
          %v1552 = vpack.c.b16 %v1484, %v1480
          %v1553 = vpack.c.b16 %v1485, %v1481
          %v1554 = vpack.c.b16 %v1486, %v1482
          %v1555 = vpack.c.b16 %v1491, %v1487
          %v1556 = vpack.c.b16 %v1492, %v1488
          %v1557 = vpack.c.b16 %v1493, %v1489
          %v1558 = vpack.c.b16 %v1494, %v1490
          %1623 = vmatpush.bf16.msra.mxu0 %v1523
          %1624 = vmatpush.bf16.msra.mxu0 %v1519
          %1625 = vmatpush.bf16.msra.mxu0 %v1515
          %1626 = vmatpush.bf16.msra.mxu0 %v1511
          %1627 = vmatpush.bf16.msra.mxu0 %v1507
          %1628 = vmatpush.bf16.msra.mxu0 %v1503
          %1629 = vmatpush.bf16.msra.mxu0 %v1499
          %1630 = vmatpush.bf16.msra.mxu0 %v1495
          %1631 = vmatmul.bf16.gmra.mxu0 %v1299
          %v1632 = vpop.f32.mrf.mxu0
          %v1633 = vadd.f32 %v1288, %v1632
          %v1634 = vpop.f32.mrf.mxu0
          %1635 = vdwg.mxu0
          %1636 = vmatpush.bf16.msra.mxu0 %v1555
          %1637 = vmatpush.bf16.msra.mxu0 %v1551
          %1638 = vmatpush.bf16.msra.mxu0 %v1547
          %1639 = vmatpush.bf16.msra.mxu0 %v1543
          %1640 = vmatpush.bf16.msra.mxu0 %v1539
          %1641 = vmatpush.bf16.msra.mxu0 %v1535
          %1642 = vmatpush.bf16.msra.mxu0 %v1531
          %1643 = vmatpush.bf16.msra.mxu0 %v1527
          %1644 = vmatmul.bf16.gmra.mxu0 %v1300
          %v1645 = vpop.f32.mrf.mxu0
          %v1646 = vadd.f32 %v1633, %v1645
          %v1647 = vpop.f32.mrf.mxu0
          %1648 = vdwg.mxu0
          %1649 = vmatpush.bf16.msra.mxu0 %v1524
          %1650 = vmatpush.bf16.msra.mxu0 %v1520
          %1651 = vmatpush.bf16.msra.mxu0 %v1516
          %1652 = vmatpush.bf16.msra.mxu0 %v1512
          %1653 = vmatpush.bf16.msra.mxu0 %v1508
          %1654 = vmatpush.bf16.msra.mxu0 %v1504
          %1655 = vmatpush.bf16.msra.mxu0 %v1500
          %1656 = vmatpush.bf16.msra.mxu0 %v1496
          %1657 = vmatmul.bf16.gmra.mxu0 %v1299
          %v1658 = vpop.f32.mrf.mxu0
          %v1659 = vadd.f32 %v1289, %v1658
          %v1660 = vpop.f32.mrf.mxu0
          %1661 = vdwg.mxu0
          %1662 = vmatpush.bf16.msra.mxu0 %v1556
          %1663 = vmatpush.bf16.msra.mxu0 %v1552
          %1664 = vmatpush.bf16.msra.mxu0 %v1548
          %1665 = vmatpush.bf16.msra.mxu0 %v1544
          %1666 = vmatpush.bf16.msra.mxu0 %v1540
          %1667 = vmatpush.bf16.msra.mxu0 %v1536
          %1668 = vmatpush.bf16.msra.mxu0 %v1532
          %1669 = vmatpush.bf16.msra.mxu0 %v1528
          %1670 = vmatmul.bf16.gmra.mxu0 %v1300
          %v1671 = vpop.f32.mrf.mxu0
          %v1672 = vadd.f32 %v1659, %v1671
          %v1673 = vpop.f32.mrf.mxu0
          %1674 = vdwg.mxu0
          %1675 = vmatpush.bf16.msra.mxu0 %v1525
          %1676 = vmatpush.bf16.msra.mxu0 %v1521
          %1677 = vmatpush.bf16.msra.mxu0 %v1517
          %1678 = vmatpush.bf16.msra.mxu0 %v1513
          %1679 = vmatpush.bf16.msra.mxu0 %v1509
          %1680 = vmatpush.bf16.msra.mxu0 %v1505
          %1681 = vmatpush.bf16.msra.mxu0 %v1501
          %1682 = vmatpush.bf16.msra.mxu0 %v1497
          %1683 = vmatmul.bf16.gmra.mxu0 %v1299
          %v1684 = vpop.f32.mrf.mxu0
          %v1685 = vadd.f32 %v1290, %v1684
          %v1686 = vpop.f32.mrf.mxu0
          %1687 = vdwg.mxu0
          %1688 = vmatpush.bf16.msra.mxu0 %v1557
          %1689 = vmatpush.bf16.msra.mxu0 %v1553
          %1690 = vmatpush.bf16.msra.mxu0 %v1549
          %1691 = vmatpush.bf16.msra.mxu0 %v1545
          %1692 = vmatpush.bf16.msra.mxu0 %v1541
          %1693 = vmatpush.bf16.msra.mxu0 %v1537
          %1694 = vmatpush.bf16.msra.mxu0 %v1533
          %1695 = vmatpush.bf16.msra.mxu0 %v1529
          %1696 = vmatmul.bf16.gmra.mxu0 %v1300
          %v1697 = vpop.f32.mrf.mxu0
          %v1698 = vadd.f32 %v1685, %v1697
          %v1699 = vpop.f32.mrf.mxu0
          %1700 = vdwg.mxu0
          %1701 = vmatpush.bf16.msra.mxu0 %v1526
          %1702 = vmatpush.bf16.msra.mxu0 %v1522
          %1703 = vmatpush.bf16.msra.mxu0 %v1518
          %1704 = vmatpush.bf16.msra.mxu0 %v1514
          %1705 = vmatpush.bf16.msra.mxu0 %v1510
          %1706 = vmatpush.bf16.msra.mxu0 %v1506
          %1707 = vmatpush.bf16.msra.mxu0 %v1502
          %1708 = vmatpush.bf16.msra.mxu0 %v1498
          %1709 = vmatmul.bf16.gmra.mxu0 %v1299
          %v1710 = vpop.f32.mrf.mxu0
          %v1711 = vadd.f32 %v1291, %v1710
          %v1712 = vpop.f32.mrf.mxu0
          %1713 = vdwg.mxu0
          %1714 = vmatpush.bf16.msra.mxu0 %v1558
          %1715 = vmatpush.bf16.msra.mxu0 %v1554
          %1716 = vmatpush.bf16.msra.mxu0 %v1550
          %1717 = vmatpush.bf16.msra.mxu0 %v1546
          %1718 = vmatpush.bf16.msra.mxu0 %v1542
          %1719 = vmatpush.bf16.msra.mxu0 %v1538
          %1720 = vmatpush.bf16.msra.mxu0 %v1534
          %1721 = vmatpush.bf16.msra.mxu0 %v1530
          %1722 = vmatmul.bf16.gmra.mxu0 %v1300
          %v1723 = vpop.f32.mrf.mxu0
          %v1724 = vadd.f32 %v1711, %v1723
          %v1725 = vpop.f32.mrf.mxu0
          %1726 = vdwg.mxu0
          %v1727 = vxor.u32 %v1646, 2147483648
          %v1728 = vxor.u32 %v1672, 2147483648
          %v1729 = vxor.u32 %v1698, 2147483648
          %v1730 = vmul.f32 %v1727, 1.442695
          %v1731 = vpow.pop %v1730
          %v1732 = vmul.f32 %v1728, 1.442695
          %v1733 = vpow.pop %v1732
          %v1734 = vmul.f32 %v1729, 1.442695
          %v1735 = vpow.pop %v1734
          %v1736 = vadd.f32 %v1731, 1.0
          %v1737 = vadd.f32 %v1733, 1.0
          %v1738 = vadd.f32 %v1735, 1.0
          %v1739 = vrcp.pop %v1736
          %v1740 = vmul.f32 %v1736, %v1739
          %v1741 = vsub.f32 1.0, %v1740
          %v1742 = vmul.f32 %v1739, %v1741
          %v1743 = vadd.f32 %v1739, %v1742
          %vm1744 = vweird.f32 %v1736
          %vm1745 = vweird.f32 %v1739
          %vm1746 = vmor %vm1744, %vm1745
          %v1747 = vsel %vm1746, %v1739, %v1743
          %v1748 = vand.u32 2147483647, %v1736
          %vm1749 = vcmp.eq.f32.partialorder %v1748, 8.507059e+37
          %v1750 = vand.u32 %v1736, 2147483648
          %v1751 = vor.u32 1.1754944e-38, %v1750
          %v1752 = vsel %vm1749, %v1751, %v1747
          %v1753 = vmul.f32 1.0, %v1752
          %v1754 = vrcp.pop %v1737
          %v1755 = vmul.f32 %v1737, %v1754
          %v1756 = vsub.f32 1.0, %v1755
          %v1757 = vmul.f32 %v1754, %v1756
          %v1758 = vadd.f32 %v1754, %v1757
          %vm1759 = vweird.f32 %v1737
          %vm1760 = vweird.f32 %v1754
          %vm1761 = vmor %vm1759, %vm1760
          %v1762 = vsel %vm1761, %v1754, %v1758
          %v1763 = vand.u32 2147483647, %v1737
          %vm1764 = vcmp.eq.f32.partialorder %v1763, 8.507059e+37
          %v1765 = vand.u32 %v1737, 2147483648
          %v1766 = vor.u32 1.1754944e-38, %v1765
          %v1767 = vsel %vm1764, %v1766, %v1762
          %v1768 = vmul.f32 1.0, %v1767
          %v1769 = vrcp.pop %v1738
          %v1770 = vmul.f32 %v1738, %v1769
          %v1771 = vsub.f32 1.0, %v1770
          %v1772 = vmul.f32 %v1769, %v1771
          %v1773 = vadd.f32 %v1769, %v1772
          %vm1774 = vweird.f32 %v1738
          %vm1775 = vweird.f32 %v1769
          %vm1776 = vmor %vm1774, %vm1775
          %v1777 = vsel %vm1776, %v1769, %v1773
          %v1778 = vand.u32 2147483647, %v1738
          %vm1779 = vcmp.eq.f32.partialorder %v1778, 8.507059e+37
          %v1780 = vand.u32 %v1738, 2147483648
          %v1781 = vor.u32 1.1754944e-38, %v1780
          %v1782 = vsel %vm1779, %v1781, %v1777
          %v1783 = vmul.f32 1.0, %v1782
          %v1784 = vtanh.pop %v1724
          %v1785 = vmul.f32 %v1768, %v1216
          %v1786 = vmul.f32 %v1753, %v1784
          %v1787 = vadd.f32 %v1785, %v1786
          %v1788 = vtanh.pop %v1787
          %v1789 = vmul.f32 %v1783, %v1788
          %s1790 = scalar_lea.vmem [#allocation19], 8
          %1791 = vst [vmem:[%s1790] sm:$0xff] %v1789
          %s1792 = scalar_lea.vmem [#allocation21], 8
          %1793 = vst [vmem:[%s1792] sm:$0xff] %v1787
          %v1794 = vpack.c.bf16 %v1789, %v1789
          %1795 = vst [vmem:[#allocation3] sm:$0xf] %v1794
          %v1796 = vld [vmem:[#allocation3] sm:$0xf]
          %1797 = vst [vmem:[#allocation4] sm:$0xf] %v1796
        $region72: #{tpu_custom_call.1} parent=43 // pred_fallthru
          _
        %v1798 = vld [vmem:[#allocation4] sm:$0xf]
        %v1799 = vld [vmem:[%s374] sm:$0xff]
        %v1800 = vld [vmem:[%s374 + $0x8] sm:$0xff]
        %v1801 = vld [vmem:[%s374 + $0x10] sm:$0xff]
        %v1802 = vld [vmem:[%s374 + $0x18] sm:$0xff]
        %v1803 = vld [vmem:[%s374 + $0x20] sm:$0xff]
        %v1804 = vld [vmem:[%s374 + $0x28] sm:$0xff]
        %v1805 = vld [vmem:[%s374 + $0x30] sm:$0xff]
        %v1806 = vld [vmem:[%s374 + $0x38] sm:$0xff]
        %v1807 = vld [vmem:[%s374 + $0x40] sm:$0xff]
        %v1808 = vld [vmem:[%s374 + $0x48] sm:$0xff]
        %v1809 = vld [vmem:[%s374 + $0x50] sm:$0xff]
        %v1810 = vld [vmem:[%s374 + $0x58] sm:$0xff]
        %v1811 = vld [vmem:[%s374 + $0x60] sm:$0xff]
        %v1812 = vld [vmem:[%s374 + $0x68] sm:$0xff]
        %v1813 = vld [vmem:[%s374 + $0x70] sm:$0xff]
        %v1814 = vld [vmem:[%s374 + $0x78] sm:$0xff]
        %v1815 = vld [vmem:[%s374 + $0x80] sm:$0xff]
        %v1816 = vld [vmem:[%s374 + $0x88] sm:$0xff]
        %v1817 = vld [vmem:[%s374 + $0x90] sm:$0xff]
        %v1818 = vld [vmem:[%s374 + $0x98] sm:$0xff]
        %v1819 = vld [vmem:[%s374 + $0xa0] sm:$0xff]
        %v1820 = vld [vmem:[%s374 + $0xa8] sm:$0xff]
        %v1821 = vld [vmem:[%s374 + $0xb0] sm:$0xff]
        %v1822 = vld [vmem:[%s374 + $0xb8] sm:$0xff]
        %v1823 = vld [vmem:[%s374 + $0xc0] sm:$0xff]
        %v1824 = vld [vmem:[%s374 + $0xc8] sm:$0xff]
        %v1825 = vld [vmem:[%s374 + $0xd0] sm:$0xff]
        %v1826 = vld [vmem:[%s374 + $0xd8] sm:$0xff]
        %v1827 = vld [vmem:[%s374 + $0xe0] sm:$0xff]
        %v1828 = vld [vmem:[%s374 + $0xe8] sm:$0xff]
        %v1829 = vld [vmem:[%s374 + $0xf0] sm:$0xff]
        %v1830 = vld [vmem:[%s374 + $0xf8] sm:$0xff]
        %v1831 = vld [vmem:[%s384] sm:$0xf]
        %v1833 = vperm.slane %v1831, 0
        %v1834 = vperm.slane %v1831, 1
        %v1835 = vperm.slane %v1831, 2
        %v1836 = vperm.slane %v1831, 3
        %v1873 = vunpack.c.l.b16 %v1799
        %v1874 = vunpack.c.h.b16 %v1799
        %v1875 = vunpack.c.l.b16 %v1800
        %v1876 = vunpack.c.h.b16 %v1800
        %v1877 = vunpack.c.l.b16 %v1801
        %v1878 = vunpack.c.h.b16 %v1801
        %v1879 = vunpack.c.l.b16 %v1802
        %v1880 = vunpack.c.h.b16 %v1802
        %v1881 = vunpack.c.l.b16 %v1803
        %v1882 = vunpack.c.h.b16 %v1803
        %v1883 = vunpack.c.l.b16 %v1804
        %v1884 = vunpack.c.h.b16 %v1804
        %v1885 = vunpack.c.l.b16 %v1805
        %v1886 = vunpack.c.h.b16 %v1805
        %v1887 = vunpack.c.l.b16 %v1806
        %v1888 = vunpack.c.h.b16 %v1806
        %v1889 = vunpack.c.l.b16 %v1807
        %v1890 = vunpack.c.h.b16 %v1807
        %v1891 = vunpack.c.l.b16 %v1808
        %v1892 = vunpack.c.h.b16 %v1808
        %v1893 = vunpack.c.l.b16 %v1809
        %v1894 = vunpack.c.h.b16 %v1809
        %v1895 = vunpack.c.l.b16 %v1810
        %v1896 = vunpack.c.h.b16 %v1810
        %v1897 = vunpack.c.l.b16 %v1811
        %v1898 = vunpack.c.h.b16 %v1811
        %v1899 = vunpack.c.l.b16 %v1812
        %v1900 = vunpack.c.h.b16 %v1812
        %v1901 = vunpack.c.l.b16 %v1813
        %v1902 = vunpack.c.h.b16 %v1813
        %v1903 = vunpack.c.l.b16 %v1814
        %v1904 = vunpack.c.h.b16 %v1814
        %v1905 = vunpack.c.l.b16 %v1815
        %v1906 = vunpack.c.h.b16 %v1815
        %v1907 = vunpack.c.l.b16 %v1816
        %v1908 = vunpack.c.h.b16 %v1816
        %v1909 = vunpack.c.l.b16 %v1817
        %v1910 = vunpack.c.h.b16 %v1817
        %v1911 = vunpack.c.l.b16 %v1818
        %v1912 = vunpack.c.h.b16 %v1818
        %v1913 = vunpack.c.l.b16 %v1819
        %v1914 = vunpack.c.h.b16 %v1819
        %v1915 = vunpack.c.l.b16 %v1820
        %v1916 = vunpack.c.h.b16 %v1820
        %v1917 = vunpack.c.l.b16 %v1821
        %v1918 = vunpack.c.h.b16 %v1821
        %v1919 = vunpack.c.l.b16 %v1822
        %v1920 = vunpack.c.h.b16 %v1822
        %v1921 = vunpack.c.l.b16 %v1823
        %v1922 = vunpack.c.h.b16 %v1823
        %v1923 = vunpack.c.l.b16 %v1824
        %v1924 = vunpack.c.h.b16 %v1824
        %v1925 = vunpack.c.l.b16 %v1825
        %v1926 = vunpack.c.h.b16 %v1825
        %v1927 = vunpack.c.l.b16 %v1826
        %v1928 = vunpack.c.h.b16 %v1826
        %v1929 = vunpack.c.l.b16 %v1827
        %v1930 = vunpack.c.h.b16 %v1827
        %v1931 = vunpack.c.l.b16 %v1828
        %v1932 = vunpack.c.h.b16 %v1828
        %v1933 = vunpack.c.l.b16 %v1829
        %v1934 = vunpack.c.h.b16 %v1829
        %v1935 = vunpack.c.l.b16 %v1830
        %v1936 = vunpack.c.h.b16 %v1830
        %v1937 = vpack.c.b16 %v1877, %v1873
        %v1938 = vpack.c.b16 %v1878, %v1874
        %v1939 = vpack.c.b16 %v1879, %v1875
        %v1940 = vpack.c.b16 %v1880, %v1876
        %v1941 = vpack.c.b16 %v1885, %v1881
        %v1942 = vpack.c.b16 %v1886, %v1882
        %v1943 = vpack.c.b16 %v1887, %v1883
        %v1944 = vpack.c.b16 %v1888, %v1884
        %v1945 = vpack.c.b16 %v1893, %v1889
        %v1946 = vpack.c.b16 %v1894, %v1890
        %v1947 = vpack.c.b16 %v1895, %v1891
        %v1948 = vpack.c.b16 %v1896, %v1892
        %v1949 = vpack.c.b16 %v1901, %v1897
        %v1950 = vpack.c.b16 %v1902, %v1898
        %v1951 = vpack.c.b16 %v1903, %v1899
        %v1952 = vpack.c.b16 %v1904, %v1900
        %v1953 = vpack.c.b16 %v1909, %v1905
        %v1954 = vpack.c.b16 %v1910, %v1906
        %v1955 = vpack.c.b16 %v1911, %v1907
        %v1956 = vpack.c.b16 %v1912, %v1908
        %v1957 = vpack.c.b16 %v1917, %v1913
        %v1958 = vpack.c.b16 %v1918, %v1914
        %v1959 = vpack.c.b16 %v1919, %v1915
        %v1960 = vpack.c.b16 %v1920, %v1916
        %v1961 = vpack.c.b16 %v1925, %v1921
        %v1962 = vpack.c.b16 %v1926, %v1922
        %v1963 = vpack.c.b16 %v1927, %v1923
        %v1964 = vpack.c.b16 %v1928, %v1924
        %v1965 = vpack.c.b16 %v1933, %v1929
        %v1966 = vpack.c.b16 %v1934, %v1930
        %v1967 = vpack.c.b16 %v1935, %v1931
        %v1968 = vpack.c.b16 %v1936, %v1932
        %2001 = vmatpush.bf16.msra.mxu0 %v1965
        %2002 = vmatpush.bf16.msra.mxu0 %v1961
        %2003 = vmatpush.bf16.msra.mxu0 %v1957
        %2004 = vmatpush.bf16.msra.mxu0 %v1953
        %2005 = vmatpush.bf16.msra.mxu0 %v1949
        %2006 = vmatpush.bf16.msra.mxu0 %v1945
        %2007 = vmatpush.bf16.msra.mxu0 %v1941
        %2008 = vmatpush.bf16.msra.mxu0 %v1937
        %2009 = vmatmul.bf16.gmra.mxu0 %v1798
        %v2010 = vpop.f32.mrf.mxu0
        %v2011 = vadd.f32 %v1833, %v2010
        %v2012 = vpop.f32.mrf.mxu0
        %2013 = vdwg.mxu0
        %2014 = vmatpush.bf16.msra.mxu0 %v1966
        %2015 = vmatpush.bf16.msra.mxu0 %v1962
        %2016 = vmatpush.bf16.msra.mxu0 %v1958
        %2017 = vmatpush.bf16.msra.mxu0 %v1954
        %2018 = vmatpush.bf16.msra.mxu0 %v1950
        %2019 = vmatpush.bf16.msra.mxu0 %v1946
        %2020 = vmatpush.bf16.msra.mxu0 %v1942
        %2021 = vmatpush.bf16.msra.mxu0 %v1938
        %2022 = vmatmul.bf16.gmra.mxu0 %v1798
        %v2023 = vpop.f32.mrf.mxu0
        %v2024 = vadd.f32 %v1834, %v2023
        %v2025 = vpop.f32.mrf.mxu0
        %2026 = vdwg.mxu0
        %2027 = vmatpush.bf16.msra.mxu0 %v1967
        %2028 = vmatpush.bf16.msra.mxu0 %v1963
        %2029 = vmatpush.bf16.msra.mxu0 %v1959
        %2030 = vmatpush.bf16.msra.mxu0 %v1955
        %2031 = vmatpush.bf16.msra.mxu0 %v1951
        %2032 = vmatpush.bf16.msra.mxu0 %v1947
        %2033 = vmatpush.bf16.msra.mxu0 %v1943
        %2034 = vmatpush.bf16.msra.mxu0 %v1939
        %2035 = vmatmul.bf16.gmra.mxu0 %v1798
        %v2036 = vpop.f32.mrf.mxu0
        %v2037 = vadd.f32 %v1835, %v2036
        %v2038 = vpop.f32.mrf.mxu0
        %2039 = vdwg.mxu0
        %2040 = vmatpush.bf16.msra.mxu0 %v1968
        %2041 = vmatpush.bf16.msra.mxu0 %v1964
        %2042 = vmatpush.bf16.msra.mxu0 %v1960
        %2043 = vmatpush.bf16.msra.mxu0 %v1956
        %2044 = vmatpush.bf16.msra.mxu0 %v1952
        %2045 = vmatpush.bf16.msra.mxu0 %v1948
        %2046 = vmatpush.bf16.msra.mxu0 %v1944
        %2047 = vmatpush.bf16.msra.mxu0 %v1940
        %2048 = vmatmul.bf16.gmra.mxu0 %v1798
        %v2049 = vpop.f32.mrf.mxu0
        %v2050 = vadd.f32 %v1836, %v2049
        %v2051 = vpop.f32.mrf.mxu0
        %2052 = vdwg.mxu0
        %2053 = vst [vmem:[%s419] sm:$0xff] %v2011
        %2054 = vst [vmem:[%s419 + $0x8] sm:$0xff] %v2024
        %2055 = vst [vmem:[%s419 + $0x10] sm:$0xff] %v2037
        %2056 = vst [vmem:[%s419 + $0x18] sm:$0xff] %v2050
        %s2057 = sand.u32 %s176, 1
        %s2058 = scalar_lea.sflag [#allocation9], %s2057
        %s2059 = sand.u32 %s176, 1
        %s2060 = smul.addr %s2059, 32
        %s2061 = scalar_lea.vmem [#allocation18], %s2060
        // Predicated region
        $region109: #{tpu_custom_call.1} parent=43 // pred_check
          %p2062 = pneg %p186
        $region110: #{tpu_custom_call.1} parent=43 // pred_check_branch
          %2064 = sbr.rel (%p2062) target = $region112
        $region111: #{tpu_custom_call.1} parent=43 // pred_region
          %s2065 = smul.u32 4, %s32
          %2067 = vsyncadd %s2058, 0
          %s2068 = smul.addr %s2065, 8
          %s2069 = scalar_lea.hbm %s8, %s2068
          %s2071 = sshll.u32 %s2061, 4
          %s2072 = int_to_ptr.vmem [resolvable:$true] %s2071
          %s2073 = sshll.u32 %s2069, 4
          %s2074 = int_to_ptr.hbm [resolvable:$true] %s2073
          %2076 = dma.vmem_to_hbm [thread:$0]  %s2072, 512, %s2074, %s2058
        $region112: #{tpu_custom_call.1} parent=43 // pred_fallthru
          _
        // Predicated region
        $region113: #{tpu_custom_call.1} parent=43 // pred_check
          %p2077 = pneg %p207
        $region114: #{tpu_custom_call.1} parent=43 // pred_check_branch
          %2079 = sbr.rel (%p2077) target = $region116
        $region115: #{tpu_custom_call.1} parent=43 // pred_region
          %2081 = vsyncadd [#allocation20], 0
          %s2082 = sshll.u32 [#allocation19], 4
          %s2083 = int_to_ptr.vmem [resolvable:$true] %s2082
          %s2084 = sshll.u32 %s9, 4
          %s2085 = int_to_ptr.hbm [resolvable:$true] %s2084
          %2090 = dma.vmem_to_hbm [thread:$0]  %s2083, 256, %s2085, [#allocation20], 128, 128, 8
        $region116: #{tpu_custom_call.1} parent=43 // pred_fallthru
          _
        // Predicated region
        $region117: #{tpu_custom_call.1} parent=43 // pred_check
          %p2091 = pneg %p228
        $region118: #{tpu_custom_call.1} parent=43 // pred_check_branch
          %2093 = sbr.rel (%p2091) target = $region120
        $region119: #{tpu_custom_call.1} parent=43 // pred_region
          %2095 = vsyncadd [#allocation20], 0
          %s2096 = sshll.u32 [#allocation21], 4
          %s2097 = int_to_ptr.vmem [resolvable:$true] %s2096
          %s2098 = sshll.u32 %s10, 4
          %s2099 = int_to_ptr.hbm [resolvable:$true] %s2098
          %2104 = dma.vmem_to_hbm [thread:$0]  %s2097, 256, %s2099, [#allocation20], 128, 128, 8
        $region120: #{tpu_custom_call.1} parent=43 // pred_fallthru
          _
        // Predicated region
        $region121: #{tpu_custom_call.1} parent=43 // pred_check
          %p2105 = pneg %p207
        $region122: #{tpu_custom_call.1} parent=43 // pred_check_branch
          %2107 = sbr.rel (%p2105) target = $region124
        $region123: #{tpu_custom_call.1} parent=43 // pred_region
          %2109 = dma.done [#allocation20], 256
        $region124: #{tpu_custom_call.1} parent=43 // pred_fallthru
          _
        // Predicated region
        $region125: #{tpu_custom_call.1} parent=43 // pred_check
          %p2110 = pneg %p228
        $region126: #{tpu_custom_call.1} parent=43 // pred_check_branch
          %2112 = sbr.rel (%p2110) target = $region128
        $region127: #{tpu_custom_call.1} parent=43 // pred_region
          %2114 = dma.done [#allocation20], 256
        $region128: #{tpu_custom_call.1} parent=43 // pred_fallthru
          _
      $region44: #{tpu_custom_call.1} parent=5 // pred_fallthru
        _
      %p2115 = scmp.le.s32.totalorder 2, %s27
      // Predicated region
      $region129: #{tpu_custom_call.1} parent=5 // pred_check
        %p2116 = pneg %p2115
      $region130: #{tpu_custom_call.1} parent=5 // pred_check_branch
        %2118 = sbr.rel (%p2116) target = $region132
      $region131: #{tpu_custom_call.1} parent=5 // pred_region
        %s2119 = ssub.s32 %s27, 2
        // Predicated region
        $region133: #{tpu_custom_call.1} parent=131 // pred_check
          %p2120 = pneg %p192
        $region134: #{tpu_custom_call.1} parent=131 // pred_check_branch
          %2122 = sbr.rel (%p2120) target = $region136
        $region135: #{tpu_custom_call.1} parent=131 // pred_region
          %s2123 = sand.u32 %s177, 1
          %s2124 = scalar_lea.sflag [#allocation9], %s2123
          %s2125 = sand.u32 %s177, 1
          %s2126 = smul.addr %s2125, 32
          %s2127 = scalar_lea.vmem [#allocation18], %s2126
          %2129 = dma.done %s2124, 512
        $region136: #{tpu_custom_call.1} parent=131 // pred_fallthru
          _
      $region132: #{tpu_custom_call.1} parent=5 // pred_fallthru
        _
    $region6: #{tpu_custom_call.1} parent=1 // loop_footer
      %s31 = sadd.s32 1, %s27
    $region7: #{tpu_custom_call.1} parent=1 // loop_footer_branch
      %26 = sbr.rel target = $region3
    $region8: #{tpu_custom_call.1} parent=1 // loop_exit
      _
    %2130 = vsyncpa [#allocation8], 1
    %s2131 = scalar_lea.sflag [#allocation8], 1
    %2132 = vsyncpa %s2131, 1
    %2133 = vsyncpa [#allocation13], 1
    %2134 = vsyncpa [#allocation16], 1
    %s2135 = scalar_lea.sflag [#allocation16], 1
    %2136 = vsyncpa %s2135, 1
    %2137 = vsyncpa [#allocation9], 1
    %s2138 = scalar_lea.sflag [#allocation9], 1
    %2139 = vsyncpa %s2138, 1
    %2140 = vsyncpa [#allocation20], 1
    %2141 = vsyncpa [#allocation10], 1
    %s2142 = scalar_lea.sflag [#allocation10], 1
    %2143 = vsyncpa %s2142, 1
  %2144 = vsyncmov [#allocation6]
  %s2145 = vpop.sfrf %2144
  %p2146 = scmp.eq.s32.totalorder %s2145, 0
  %p2147 = pneg %p2146
  %2149 = shalt.err (%p2147)
  %s2150 = scalar_lea.sflag [#allocation6], 1
  %2151 = vsyncmov %s2150
  %s2152 = vpop.sfrf %2151
  %p2153 = scmp.eq.s32.totalorder %s2152, 0
  %p2154 = pneg %p2153
  %2156 = shalt.err (%p2154)
  %s2157 = scalar_lea.sflag [#allocation6], 2
  %2158 = vsyncmov %s2157
  %s2159 = vpop.sfrf %2158
  %p2160 = scmp.eq.s32.totalorder %s2159, 0
  %p2161 = pneg %p2160
  %2163 = shalt.err (%p2161)
  %s2164 = scalar_lea.sflag [#allocation6], 3
  %2165 = vsyncmov %s2164
  %s2166 = vpop.sfrf %2165
  %p2167 = scmp.eq.s32.totalorder %s2166, 0
  %p2168 = pneg %p2167
  %2170 = shalt.err (%p2168)
  %s2171 = scalar_lea.sflag [#allocation6], 4
  %2172 = vsyncmov %s2171
  %s2173 = vpop.sfrf %2172
  %p2174 = scmp.eq.s32.totalorder %s2173, 0
  %p2175 = pneg %p2174
  %2177 = shalt.err (%p2175)
  %s2178 = scalar_lea.sflag [#allocation6], 5
  %2179 = vsyncmov %s2178
  %s2180 = vpop.sfrf %2179
  %p2181 = scmp.eq.s32.totalorder %s2180, 0
  %p2182 = pneg %p2181
  %2184 = shalt.err (%p2182)
  %s2185 = scalar_lea.sflag [#allocation6], 6
  %2186 = vsyncmov %s2185
  %s2187 = vpop.sfrf %2186
  %p2188 = scmp.eq.s32.totalorder %s2187, 0
  %p2189 = pneg %p2188
  %2191 = shalt.err (%p2189)
  %s2192 = scalar_lea.sflag [#allocation6], 7
  %2193 = vsyncmov %s2192
  %s2194 = vpop.sfrf %2193
  %p2195 = scmp.eq.s32.totalorder %s2194, 0
  %p2196 = pneg %p2195
  %2198 = shalt.err (%p2196)
  %s2199 = scalar_lea.sflag [#allocation6], 8
  %2200 = vsyncmov %s2199
  %s2201 = vpop.sfrf %2200
  %p2202 = scmp.eq.s32.totalorder %s2201, 0
  %p2203 = pneg %p2202
  %2205 = shalt.err (%p2203)

</llo_original>
